<compile_context>
chip_gen: v7x
topology: tpu7x:2x2x1
jax: 0.10.0
libtpu: 0.0.40
codegen_flags: <defaults>
</compile_context>

<pallas_src>
import functools

import jax
import jax.numpy as jnp
from jax.experimental import pallas as pl
from jax.experimental.pallas import tpu as pltpu


NC_PAD = 128  # lane-dense padded width for the FC head output
BP = 8        # sublane-padded batch rows per timestep
IP = 8        # sublane-padded input-feature dim


def _sigmoid(x):
    return 1.0 / (1.0 + jnp.exp(-x))


# ----------------------------------------------------------------------------
# Pallas kernel: full FatigueRNN forward (2-layer LSTM + FC) in one block.
# ----------------------------------------------------------------------------
def _fatigue_rnn_kernel(x_ref, wih1_ref, b1_ref, whh1_ref,
                        w2_ref, b2_ref, fcw_ref, fcb_ref, out_ref, *, T, H):
    f32 = jnp.float32
    bf16 = jnp.bfloat16

    # Layer-1 input projection for ALL timesteps in one matmul (bias folded).
    # x_ref is time-major, row = t*BP + b  ->  (T*BP, 4H) f32.
    xproj1 = jnp.dot(x_ref[...], wih1_ref[...],
                     preferred_element_type=f32) + b1_ref[...]

    whh1 = whh1_ref[...]   # (H, 4H)  bf16, i/f/o columns pre-scaled by 0.5
    w2 = w2_ref[...]       # (2H, 4H) bf16, stacked [wih2; whh2], pre-scaled
    b2 = b2_ref[...]       # (1, 4H)  f32, pre-scaled

    h1 = jnp.zeros((BP, H), f32)
    c1 = jnp.zeros((BP, H), f32)
    h2 = jnp.zeros((BP, H), f32)
    c2 = jnp.zeros((BP, H), f32)

    def cell(gates, c_prev):
        # i/f/o pre-activations were scaled by 0.5 at trace time so that
        # sigmoid(z) == 0.5*tanh(z/2) + 0.5; one full-slab tanh covers all
        # four gates (the g gate already wants a plain tanh).
        t = jnp.tanh(gates)
        i = 0.5 * t[:, 0 * H:1 * H] + 0.5
        f = 0.5 * t[:, 1 * H:2 * H] + 0.5
        g = t[:, 2 * H:3 * H]
        o = 0.5 * t[:, 3 * H:4 * H] + 0.5
        c = f * c_prev + i * g
        h = o * jnp.tanh(c)
        return h, c

    # Recurrence: T is a small static trip count -> unrolled, all slices are
    # static and 8-sublane aligned (BP=8 rows per step).
    for t in range(T):
        g1 = xproj1[t * BP:(t + 1) * BP, :] + jnp.dot(
            h1.astype(bf16), whh1, preferred_element_type=f32)
        h1, c1 = cell(g1, c1)

        # Single K=128 matmul for layer 2: operand is [h1 | h2] on the lanes.
        h12 = jnp.concatenate([h1, h2], axis=1).astype(bf16)   # (BP, 2H)
        g2 = jnp.dot(h12, w2, preferred_element_type=f32) + b2
        h2, c2 = cell(g2, c2)

    # Dropout(0.5) is identity at inference.  FC head fused in the epilogue,
    # output padded to 128 lanes for an unmasked lane-dense store.
    out = jnp.dot(h2.astype(bf16), fcw_ref[...],
                  preferred_element_type=f32) + fcb_ref[...]
    out_ref[...] = out.astype(out_ref.dtype)


# ----------------------------------------------------------------------------
# Wrapper: PyTorch-layout params + (B, T, input_size) input -> (B, num_classes)
# ----------------------------------------------------------------------------
def fatigue_rnn_forward(params, x, num_classes=4):
    B, T, I = x.shape
    H = params["w_hh_l0"].shape[1]
    assert B <= BP and I <= IP

    # Column scale for the tanh-reparameterization of sigmoid: 0.5 on the
    # i/f/o gate columns, 1.0 on g (PyTorch gate order [i, f, g, o]).
    col_scale = jnp.concatenate([
        jnp.full((2 * H,), 0.5, jnp.float32),
        jnp.ones((H,), jnp.float32),
        jnp.full((H,), 0.5, jnp.float32),
    ])

    def prep_w(w):  # PyTorch (4H, K) -> (K, 4H), gate-scaled, bf16
        return (w.T * col_scale[None, :]).astype(jnp.bfloat16)

    def prep_b(b_ih, b_hh):  # fold + gate-scale, stays f32
        return ((b_ih + b_hh) * col_scale).reshape(1, 4 * H)

    wih1_t = prep_w(params["w_ih_l0"])                                 # (I,4H)
    wih1_pad = jnp.zeros((IP, 4 * H), jnp.bfloat16).at[:I, :].set(wih1_t)
    whh1_t = prep_w(params["w_hh_l0"])                                 # (H,4H)
    b1 = prep_b(params["b_ih_l0"], params["b_hh_l0"])

    # Layer-2: stack input and recurrent weights -> one K=2H matmul per step.
    w2 = jnp.concatenate([prep_w(params["w_ih_l1"]),
                          prep_w(params["w_hh_l1"])], axis=0)          # (2H,4H)
    b2 = prep_b(params["b_ih_l1"], params["b_hh_l1"])

    fcw_pad = jnp.zeros((H, NC_PAD), jnp.bfloat16).at[:, :num_classes].set(
        params["fc_w"].T.astype(jnp.bfloat16))
    fcb_pad = jnp.zeros((1, NC_PAD), jnp.float32).at[:, :num_classes].set(
        params["fc_b"])

    # Time-major, sublane-padded (8 rows per step) and feature-padded input.
    x_pad = jnp.zeros((T, BP, IP), jnp.bfloat16)
    x_pad = x_pad.at[:, :B, :I].set(
        jnp.transpose(x, (1, 0, 2)).astype(jnp.bfloat16))
    x_tm = x_pad.reshape(T * BP, IP)

    kernel = functools.partial(_fatigue_rnn_kernel, T=T, H=H)
    vmem = pl.BlockSpec(memory_space=pltpu.MemorySpace.VMEM)

    out_pad = pl.pallas_call(
        kernel,
        out_shape=jax.ShapeDtypeStruct((BP, NC_PAD), jnp.float32),
        in_specs=[vmem] * 8,
        out_specs=vmem,
    )(x_tm, wih1_pad, b1, whh1_t, w2, b2, fcw_pad, fcb_pad)

    return out_pad[:B, :num_classes]


# ----------------------------------------------------------------------------
# Pure-JAX reference (same math as torch nn.LSTM / nn.Linear, eval dropout)
# ----------------------------------------------------------------------------
def reference_forward(params, x, num_classes=4):
    B, T, I = x.shape
    H = params["w_hh_l0"].shape[1]

    def lstm_layer(seq, w_ih, w_hh, b_ih, b_hh):
        h = jnp.zeros((B, H), jnp.float32)
        c = jnp.zeros((B, H), jnp.float32)
        outs = []
        for t in range(T):
            gates = seq[:, t, :] @ w_ih.T + b_ih + h @ w_hh.T + b_hh
            i = _sigmoid(gates[:, 0 * H:1 * H])
            f = _sigmoid(gates[:, 1 * H:2 * H])
            g = jnp.tanh(gates[:, 2 * H:3 * H])
            o = _sigmoid(gates[:, 3 * H:4 * H])
            c = f * c + i * g
            h = o * jnp.tanh(c)
            outs.append(h)
        return jnp.stack(outs, axis=1)

    h1 = lstm_layer(x, params["w_ih_l0"], params["w_hh_l0"],
                    params["b_ih_l0"], params["b_hh_l0"])
    h2 = lstm_layer(h1, params["w_ih_l1"], params["w_hh_l1"],
                    params["b_ih_l1"], params["b_hh_l1"])
    last = h2[:, -1, :]          # dropout = identity at eval
    return last @ params["fc_w"].T + params["fc_b"]


# ----------------------------------------------------------------------------
# Deterministic synthetic params (PyTorch LSTM/Linear-style uniform init)
# ----------------------------------------------------------------------------
def init_params(key, input_size=3, hidden_size=64, num_classes=4):
    H = hidden_size
    bound = 1.0 / (H ** 0.5)
    ks = jax.random.split(key, 10)

    def u(k, shape):
        return jax.random.uniform(k, shape, jnp.float32, -bound, bound)

    return {
        "w_ih_l0": u(ks[0], (4 * H, input_size)),
        "w_hh_l0": u(ks[1], (4 * H, H)),
        "b_ih_l0": u(ks[2], (4 * H,)),
        "b_hh_l0": u(ks[3], (4 * H,)),
        "w_ih_l1": u(ks[4], (4 * H, H)),
        "w_hh_l1": u(ks[5], (4 * H, H)),
        "b_ih_l1": u(ks[6], (4 * H,)),
        "b_hh_l1": u(ks[7], (4 * H,)),
        "fc_w":    u(ks[8], (num_classes, H)),
        "fc_b":    u(ks[9], (num_classes,)),
    }


if __name__ == "__main__":
    key = jax.random.PRNGKey(0)
    k_param, k_input = jax.random.split(key)
    params = init_params(k_param, input_size=3, hidden_size=64, num_classes=4)

    # Input: batch=2, seq_len=8, input_size=3 (batch_first, like the module).
    x = jax.random.normal(k_input, (2, 8, 3), jnp.float32)

    out = fatigue_rnn_forward(params, x, num_classes=4)
    out = jax.block_until_ready(out)
    assert out.shape == (2, 4), out.shape

    ref = jax.block_until_ready(reference_forward(params, x, num_classes=4))
    assert jnp.allclose(out, ref, atol=5e-2, rtol=5e-2), (out, ref)

    print("KERNEL_OK")
</pallas_src>

<mosaic_0001>
module attributes {stable_mosaic.version = 11 : i64} {
  func.func @_fatigue_rnn_kernel(%arg0: memref<64x8xbf16, #tpu.memory_space<vmem>>, %arg1: memref<8x256xbf16, #tpu.memory_space<vmem>>, %arg2: memref<1x256xf32, #tpu.memory_space<vmem>>, %arg3: memref<64x256xbf16, #tpu.memory_space<vmem>>, %arg4: memref<128x256xbf16, #tpu.memory_space<vmem>>, %arg5: memref<1x256xf32, #tpu.memory_space<vmem>>, %arg6: memref<64x128xbf16, #tpu.memory_space<vmem>>, %arg7: memref<1x128xf32, #tpu.memory_space<vmem>>, %arg8: memref<8x128xf32, #tpu.memory_space<vmem>>) attributes {dimension_semantics = [], scalar_prefetch = 0 : i64, scratch_operands = 0 : i64, tpu.core_type = #tpu.core_type<tc>} {
    %c0 = arith.constant 0 : index
    %c0_0 = arith.constant 0 : index
    %0 = vector.load %arg0[%c0, %c0_0] : memref<64x8xbf16, #tpu.memory_space<vmem>>, vector<64x8xbf16>
    %c0_1 = arith.constant 0 : index
    %c0_2 = arith.constant 0 : index
    %1 = vector.load %arg1[%c0_1, %c0_2] : memref<8x256xbf16, #tpu.memory_space<vmem>>, vector<8x256xbf16>
    %cst = arith.constant dense<0.000000e+00> : vector<64x256xf32>
    %2 = tpu.matmul %0, %1, %cst {dimension_numbers = #tpu.dot_dimension_numbers<[1], [0], [0], [1], [0, 0, 1, 1], [], []>} : vector<64x8xbf16>, vector<8x256xbf16>, vector<64x256xf32> -> vector<64x256xf32>
    %c0_3 = arith.constant 0 : index
    %c0_4 = arith.constant 0 : index
    %3 = vector.load %arg2[%c0_3, %c0_4] : memref<1x256xf32, #tpu.memory_space<vmem>>, vector<1x256xf32>
    %4 = vector.broadcast %3 : vector<1x256xf32> to vector<64x256xf32>
    %5 = arith.addf %2, %4 : vector<64x256xf32>
    %c0_5 = arith.constant 0 : index
    %c0_6 = arith.constant 0 : index
    %6 = vector.load %arg3[%c0_5, %c0_6] : memref<64x256xbf16, #tpu.memory_space<vmem>>, vector<64x256xbf16>
    %c0_7 = arith.constant 0 : index
    %c0_8 = arith.constant 0 : index
    %7 = vector.load %arg4[%c0_7, %c0_8] : memref<128x256xbf16, #tpu.memory_space<vmem>>, vector<128x256xbf16>
    %c0_9 = arith.constant 0 : index
    %c0_10 = arith.constant 0 : index
    %8 = vector.load %arg5[%c0_9, %c0_10] : memref<1x256xf32, #tpu.memory_space<vmem>>, vector<1x256xf32>
    %cst_11 = arith.constant 0.000000e+00 : f32
    %9 = vector.broadcast %cst_11 : f32 to vector<8x64xf32>
    %cst_12 = arith.constant 0.000000e+00 : f32
    %10 = vector.broadcast %cst_12 : f32 to vector<8x64xf32>
    %cst_13 = arith.constant 0.000000e+00 : f32
    %11 = vector.broadcast %cst_13 : f32 to vector<8x64xf32>
    %cst_14 = arith.constant 0.000000e+00 : f32
    %12 = vector.broadcast %cst_14 : f32 to vector<8x64xf32>
    %13 = vector.extract_strided_slice %5 {offsets = [0, 0], sizes = [8, 256], strides = [1, 1]} : vector<64x256xf32> to vector<8x256xf32>
    %14 = arith.truncf %9 : vector<8x64xf32> to vector<8x64xbf16>
    %cst_15 = arith.constant dense<0.000000e+00> : vector<8x256xf32>
    %15 = tpu.matmul %14, %6, %cst_15 {dimension_numbers = #tpu.dot_dimension_numbers<[1], [0], [0], [1], [0, 0, 1, 1], [], []>} : vector<8x64xbf16>, vector<64x256xbf16>, vector<8x256xf32> -> vector<8x256xf32>
    %16 = arith.addf %13, %15 : vector<8x256xf32>
    %17 = math.tanh %16 : vector<8x256xf32>
    %18 = vector.extract_strided_slice %17 {offsets = [0, 0], sizes = [8, 64], strides = [1, 1]} : vector<8x256xf32> to vector<8x64xf32>
    %cst_16 = arith.constant 5.000000e-01 : f32
    %19 = vector.broadcast %cst_16 : f32 to vector<8x64xf32>
    %20 = arith.mulf %19, %18 : vector<8x64xf32>
    %cst_17 = arith.constant 5.000000e-01 : f32
    %21 = vector.broadcast %cst_17 : f32 to vector<8x64xf32>
    %22 = arith.addf %20, %21 : vector<8x64xf32>
    %23 = vector.extract_strided_slice %17 {offsets = [0, 64], sizes = [8, 64], strides = [1, 1]} : vector<8x256xf32> to vector<8x64xf32>
    %cst_18 = arith.constant 5.000000e-01 : f32
    %24 = vector.broadcast %cst_18 : f32 to vector<8x64xf32>
    %25 = arith.mulf %24, %23 : vector<8x64xf32>
    %cst_19 = arith.constant 5.000000e-01 : f32
    %26 = vector.broadcast %cst_19 : f32 to vector<8x64xf32>
    %27 = arith.addf %25, %26 : vector<8x64xf32>
    %28 = vector.extract_strided_slice %17 {offsets = [0, 128], sizes = [8, 64], strides = [1, 1]} : vector<8x256xf32> to vector<8x64xf32>
    %29 = vector.extract_strided_slice %17 {offsets = [0, 192], sizes = [8, 64], strides = [1, 1]} : vector<8x256xf32> to vector<8x64xf32>
    %cst_20 = arith.constant 5.000000e-01 : f32
    %30 = vector.broadcast %cst_20 : f32 to vector<8x64xf32>
    %31 = arith.mulf %30, %29 : vector<8x64xf32>
    %cst_21 = arith.constant 5.000000e-01 : f32
    %32 = vector.broadcast %cst_21 : f32 to vector<8x64xf32>
    %33 = arith.addf %31, %32 : vector<8x64xf32>
    %34 = arith.mulf %27, %10 : vector<8x64xf32>
    %35 = arith.mulf %22, %28 : vector<8x64xf32>
    %36 = arith.addf %34, %35 : vector<8x64xf32>
    %37 = math.tanh %36 : vector<8x64xf32>
    %38 = arith.mulf %33, %37 : vector<8x64xf32>
    %39 = tpu.concatenate %38, %11 in 1 : vector<8x64xf32>, vector<8x64xf32> -> vector<8x128xf32>
    %40 = arith.truncf %39 : vector<8x128xf32> to vector<8x128xbf16>
    %cst_22 = arith.constant dense<0.000000e+00> : vector<8x256xf32>
    %41 = tpu.matmul %40, %7, %cst_22 {dimension_numbers = #tpu.dot_dimension_numbers<[1], [0], [0], [1], [0, 0, 1, 1], [], []>} : vector<8x128xbf16>, vector<128x256xbf16>, vector<8x256xf32> -> vector<8x256xf32>
    %42 = vector.broadcast %8 : vector<1x256xf32> to vector<8x256xf32>
    %43 = arith.addf %41, %42 : vector<8x256xf32>
    %44 = math.tanh %43 : vector<8x256xf32>
    %45 = vector.extract_strided_slice %44 {offsets = [0, 0], sizes = [8, 64], strides = [1, 1]} : vector<8x256xf32> to vector<8x64xf32>
    %cst_23 = arith.constant 5.000000e-01 : f32
    %46 = vector.broadcast %cst_23 : f32 to vector<8x64xf32>
    %47 = arith.mulf %46, %45 : vector<8x64xf32>
    %cst_24 = arith.constant 5.000000e-01 : f32
    %48 = vector.broadcast %cst_24 : f32 to vector<8x64xf32>
    %49 = arith.addf %47, %48 : vector<8x64xf32>
    %50 = vector.extract_strided_slice %44 {offsets = [0, 64], sizes = [8, 64], strides = [1, 1]} : vector<8x256xf32> to vector<8x64xf32>
    %cst_25 = arith.constant 5.000000e-01 : f32
    %51 = vector.broadcast %cst_25 : f32 to vector<8x64xf32>
    %52 = arith.mulf %51, %50 : vector<8x64xf32>
    %cst_26 = arith.constant 5.000000e-01 : f32
    %53 = vector.broadcast %cst_26 : f32 to vector<8x64xf32>
    %54 = arith.addf %52, %53 : vector<8x64xf32>
    %55 = vector.extract_strided_slice %44 {offsets = [0, 128], sizes = [8, 64], strides = [1, 1]} : vector<8x256xf32> to vector<8x64xf32>
    %56 = vector.extract_strided_slice %44 {offsets = [0, 192], sizes = [8, 64], strides = [1, 1]} : vector<8x256xf32> to vector<8x64xf32>
    %cst_27 = arith.constant 5.000000e-01 : f32
    %57 = vector.broadcast %cst_27 : f32 to vector<8x64xf32>
    %58 = arith.mulf %57, %56 : vector<8x64xf32>
    %cst_28 = arith.constant 5.000000e-01 : f32
    %59 = vector.broadcast %cst_28 : f32 to vector<8x64xf32>
    %60 = arith.addf %58, %59 : vector<8x64xf32>
    %61 = arith.mulf %54, %12 : vector<8x64xf32>
    %62 = arith.mulf %49, %55 : vector<8x64xf32>
    %63 = arith.addf %61, %62 : vector<8x64xf32>
    %64 = math.tanh %63 : vector<8x64xf32>
    %65 = arith.mulf %60, %64 : vector<8x64xf32>
    %66 = vector.extract_strided_slice %5 {offsets = [8, 0], sizes = [8, 256], strides = [1, 1]} : vector<64x256xf32> to vector<8x256xf32>
    %67 = arith.truncf %38 : vector<8x64xf32> to vector<8x64xbf16>
    %cst_29 = arith.constant dense<0.000000e+00> : vector<8x256xf32>
    %68 = tpu.matmul %67, %6, %cst_29 {dimension_numbers = #tpu.dot_dimension_numbers<[1], [0], [0], [1], [0, 0, 1, 1], [], []>} : vector<8x64xbf16>, vector<64x256xbf16>, vector<8x256xf32> -> vector<8x256xf32>
    %69 = arith.addf %66, %68 : vector<8x256xf32>
    %70 = math.tanh %69 : vector<8x256xf32>
    %71 = vector.extract_strided_slice %70 {offsets = [0, 0], sizes = [8, 64], strides = [1, 1]} : vector<8x256xf32> to vector<8x64xf32>
    %cst_30 = arith.constant 5.000000e-01 : f32
    %72 = vector.broadcast %cst_30 : f32 to vector<8x64xf32>
    %73 = arith.mulf %72, %71 : vector<8x64xf32>
    %cst_31 = arith.constant 5.000000e-01 : f32
    %74 = vector.broadcast %cst_31 : f32 to vector<8x64xf32>
    %75 = arith.addf %73, %74 : vector<8x64xf32>
    %76 = vector.extract_strided_slice %70 {offsets = [0, 64], sizes = [8, 64], strides = [1, 1]} : vector<8x256xf32> to vector<8x64xf32>
    %cst_32 = arith.constant 5.000000e-01 : f32
    %77 = vector.broadcast %cst_32 : f32 to vector<8x64xf32>
    %78 = arith.mulf %77, %76 : vector<8x64xf32>
    %cst_33 = arith.constant 5.000000e-01 : f32
    %79 = vector.broadcast %cst_33 : f32 to vector<8x64xf32>
    %80 = arith.addf %78, %79 : vector<8x64xf32>
    %81 = vector.extract_strided_slice %70 {offsets = [0, 128], sizes = [8, 64], strides = [1, 1]} : vector<8x256xf32> to vector<8x64xf32>
    %82 = vector.extract_strided_slice %70 {offsets = [0, 192], sizes = [8, 64], strides = [1, 1]} : vector<8x256xf32> to vector<8x64xf32>
    %cst_34 = arith.constant 5.000000e-01 : f32
    %83 = vector.broadcast %cst_34 : f32 to vector<8x64xf32>
    %84 = arith.mulf %83, %82 : vector<8x64xf32>
    %cst_35 = arith.constant 5.000000e-01 : f32
    %85 = vector.broadcast %cst_35 : f32 to vector<8x64xf32>
    %86 = arith.addf %84, %85 : vector<8x64xf32>
    %87 = arith.mulf %80, %36 : vector<8x64xf32>
    %88 = arith.mulf %75, %81 : vector<8x64xf32>
    %89 = arith.addf %87, %88 : vector<8x64xf32>
    %90 = math.tanh %89 : vector<8x64xf32>
    %91 = arith.mulf %86, %90 : vector<8x64xf32>
    %92 = tpu.concatenate %91, %65 in 1 : vector<8x64xf32>, vector<8x64xf32> -> vector<8x128xf32>
    %93 = arith.truncf %92 : vector<8x128xf32> to vector<8x128xbf16>
    %cst_36 = arith.constant dense<0.000000e+00> : vector<8x256xf32>
    %94 = tpu.matmul %93, %7, %cst_36 {dimension_numbers = #tpu.dot_dimension_numbers<[1], [0], [0], [1], [0, 0, 1, 1], [], []>} : vector<8x128xbf16>, vector<128x256xbf16>, vector<8x256xf32> -> vector<8x256xf32>
    %95 = vector.broadcast %8 : vector<1x256xf32> to vector<8x256xf32>
    %96 = arith.addf %94, %95 : vector<8x256xf32>
    %97 = math.tanh %96 : vector<8x256xf32>
    %98 = vector.extract_strided_slice %97 {offsets = [0, 0], sizes = [8, 64], strides = [1, 1]} : vector<8x256xf32> to vector<8x64xf32>
    %cst_37 = arith.constant 5.000000e-01 : f32
    %99 = vector.broadcast %cst_37 : f32 to vector<8x64xf32>
    %100 = arith.mulf %99, %98 : vector<8x64xf32>
    %cst_38 = arith.constant 5.000000e-01 : f32
    %101 = vector.broadcast %cst_38 : f32 to vector<8x64xf32>
    %102 = arith.addf %100, %101 : vector<8x64xf32>
    %103 = vector.extract_strided_slice %97 {offsets = [0, 64], sizes = [8, 64], strides = [1, 1]} : vector<8x256xf32> to vector<8x64xf32>
    %cst_39 = arith.constant 5.000000e-01 : f32
    %104 = vector.broadcast %cst_39 : f32 to vector<8x64xf32>
    %105 = arith.mulf %104, %103 : vector<8x64xf32>
    %cst_40 = arith.constant 5.000000e-01 : f32
    %106 = vector.broadcast %cst_40 : f32 to vector<8x64xf32>
    %107 = arith.addf %105, %106 : vector<8x64xf32>
    %108 = vector.extract_strided_slice %97 {offsets = [0, 128], sizes = [8, 64], strides = [1, 1]} : vector<8x256xf32> to vector<8x64xf32>
    %109 = vector.extract_strided_slice %97 {offsets = [0, 192], sizes = [8, 64], strides = [1, 1]} : vector<8x256xf32> to vector<8x64xf32>
    %cst_41 = arith.constant 5.000000e-01 : f32
    %110 = vector.broadcast %cst_41 : f32 to vector<8x64xf32>
    %111 = arith.mulf %110, %109 : vector<8x64xf32>
    %cst_42 = arith.constant 5.000000e-01 : f32
    %112 = vector.broadcast %cst_42 : f32 to vector<8x64xf32>
    %113 = arith.addf %111, %112 : vector<8x64xf32>
    %114 = arith.mulf %107, %63 : vector<8x64xf32>
    %115 = arith.mulf %102, %108 : vector<8x64xf32>
    %116 = arith.addf %114, %115 : vector<8x64xf32>
    %117 = math.tanh %116 : vector<8x64xf32>
    %118 = arith.mulf %113, %117 : vector<8x64xf32>
    %119 = vector.extract_strided_slice %5 {offsets = [16, 0], sizes = [8, 256], strides = [1, 1]} : vector<64x256xf32> to vector<8x256xf32>
    %120 = arith.truncf %91 : vector<8x64xf32> to vector<8x64xbf16>
    %cst_43 = arith.constant dense<0.000000e+00> : vector<8x256xf32>
    %121 = tpu.matmul %120, %6, %cst_43 {dimension_numbers = #tpu.dot_dimension_numbers<[1], [0], [0], [1], [0, 0, 1, 1], [], []>} : vector<8x64xbf16>, vector<64x256xbf16>, vector<8x256xf32> -> vector<8x256xf32>
    %122 = arith.addf %119, %121 : vector<8x256xf32>
    %123 = math.tanh %122 : vector<8x256xf32>
    %124 = vector.extract_strided_slice %123 {offsets = [0, 0], sizes = [8, 64], strides = [1, 1]} : vector<8x256xf32> to vector<8x64xf32>
    %cst_44 = arith.constant 5.000000e-01 : f32
    %125 = vector.broadcast %cst_44 : f32 to vector<8x64xf32>
    %126 = arith.mulf %125, %124 : vector<8x64xf32>
    %cst_45 = arith.constant 5.000000e-01 : f32
    %127 = vector.broadcast %cst_45 : f32 to vector<8x64xf32>
    %128 = arith.addf %126, %127 : vector<8x64xf32>
    %129 = vector.extract_strided_slice %123 {offsets = [0, 64], sizes = [8, 64], strides = [1, 1]} : vector<8x256xf32> to vector<8x64xf32>
    %cst_46 = arith.constant 5.000000e-01 : f32
    %130 = vector.broadcast %cst_46 : f32 to vector<8x64xf32>
    %131 = arith.mulf %130, %129 : vector<8x64xf32>
    %cst_47 = arith.constant 5.000000e-01 : f32
    %132 = vector.broadcast %cst_47 : f32 to vector<8x64xf32>
    %133 = arith.addf %131, %132 : vector<8x64xf32>
    %134 = vector.extract_strided_slice %123 {offsets = [0, 128], sizes = [8, 64], strides = [1, 1]} : vector<8x256xf32> to vector<8x64xf32>
    %135 = vector.extract_strided_slice %123 {offsets = [0, 192], sizes = [8, 64], strides = [1, 1]} : vector<8x256xf32> to vector<8x64xf32>
    %cst_48 = arith.constant 5.000000e-01 : f32
    %136 = vector.broadcast %cst_48 : f32 to vector<8x64xf32>
    %137 = arith.mulf %136, %135 : vector<8x64xf32>
    %cst_49 = arith.constant 5.000000e-01 : f32
    %138 = vector.broadcast %cst_49 : f32 to vector<8x64xf32>
    %139 = arith.addf %137, %138 : vector<8x64xf32>
    %140 = arith.mulf %133, %89 : vector<8x64xf32>
    %141 = arith.mulf %128, %134 : vector<8x64xf32>
    %142 = arith.addf %140, %141 : vector<8x64xf32>
    %143 = math.tanh %142 : vector<8x64xf32>
    %144 = arith.mulf %139, %143 : vector<8x64xf32>
    %145 = tpu.concatenate %144, %118 in 1 : vector<8x64xf32>, vector<8x64xf32> -> vector<8x128xf32>
    %146 = arith.truncf %145 : vector<8x128xf32> to vector<8x128xbf16>
    %cst_50 = arith.constant dense<0.000000e+00> : vector<8x256xf32>
    %147 = tpu.matmul %146, %7, %cst_50 {dimension_numbers = #tpu.dot_dimension_numbers<[1], [0], [0], [1], [0, 0, 1, 1], [], []>} : vector<8x128xbf16>, vector<128x256xbf16>, vector<8x256xf32> -> vector<8x256xf32>
    %148 = vector.broadcast %8 : vector<1x256xf32> to vector<8x256xf32>
    %149 = arith.addf %147, %148 : vector<8x256xf32>
    %150 = math.tanh %149 : vector<8x256xf32>
    %151 = vector.extract_strided_slice %150 {offsets = [0, 0], sizes = [8, 64], strides = [1, 1]} : vector<8x256xf32> to vector<8x64xf32>
    %cst_51 = arith.constant 5.000000e-01 : f32
    %152 = vector.broadcast %cst_51 : f32 to vector<8x64xf32>
    %153 = arith.mulf %152, %151 : vector<8x64xf32>
    %cst_52 = arith.constant 5.000000e-01 : f32
    %154 = vector.broadcast %cst_52 : f32 to vector<8x64xf32>
    %155 = arith.addf %153, %154 : vector<8x64xf32>
    %156 = vector.extract_strided_slice %150 {offsets = [0, 64], sizes = [8, 64], strides = [1, 1]} : vector<8x256xf32> to vector<8x64xf32>
    %cst_53 = arith.constant 5.000000e-01 : f32
    %157 = vector.broadcast %cst_53 : f32 to vector<8x64xf32>
    %158 = arith.mulf %157, %156 : vector<8x64xf32>
    %cst_54 = arith.constant 5.000000e-01 : f32
    %159 = vector.broadcast %cst_54 : f32 to vector<8x64xf32>
    %160 = arith.addf %158, %159 : vector<8x64xf32>
    %161 = vector.extract_strided_slice %150 {offsets = [0, 128], sizes = [8, 64], strides = [1, 1]} : vector<8x256xf32> to vector<8x64xf32>
    %162 = vector.extract_strided_slice %150 {offsets = [0, 192], sizes = [8, 64], strides = [1, 1]} : vector<8x256xf32> to vector<8x64xf32>
    %cst_55 = arith.constant 5.000000e-01 : f32
    %163 = vector.broadcast %cst_55 : f32 to vector<8x64xf32>
    %164 = arith.mulf %163, %162 : vector<8x64xf32>
    %cst_56 = arith.constant 5.000000e-01 : f32
    %165 = vector.broadcast %cst_56 : f32 to vector<8x64xf32>
    %166 = arith.addf %164, %165 : vector<8x64xf32>
    %167 = arith.mulf %160, %116 : vector<8x64xf32>
    %168 = arith.mulf %155, %161 : vector<8x64xf32>
    %169 = arith.addf %167, %168 : vector<8x64xf32>
    %170 = math.tanh %169 : vector<8x64xf32>
    %171 = arith.mulf %166, %170 : vector<8x64xf32>
    %172 = vector.extract_strided_slice %5 {offsets = [24, 0], sizes = [8, 256], strides = [1, 1]} : vector<64x256xf32> to vector<8x256xf32>
    %173 = arith.truncf %144 : vector<8x64xf32> to vector<8x64xbf16>
    %cst_57 = arith.constant dense<0.000000e+00> : vector<8x256xf32>
    %174 = tpu.matmul %173, %6, %cst_57 {dimension_numbers = #tpu.dot_dimension_numbers<[1], [0], [0], [1], [0, 0, 1, 1], [], []>} : vector<8x64xbf16>, vector<64x256xbf16>, vector<8x256xf32> -> vector<8x256xf32>
    %175 = arith.addf %172, %174 : vector<8x256xf32>
    %176 = math.tanh %175 : vector<8x256xf32>
    %177 = vector.extract_strided_slice %176 {offsets = [0, 0], sizes = [8, 64], strides = [1, 1]} : vector<8x256xf32> to vector<8x64xf32>
    %cst_58 = arith.constant 5.000000e-01 : f32
    %178 = vector.broadcast %cst_58 : f32 to vector<8x64xf32>
    %179 = arith.mulf %178, %177 : vector<8x64xf32>
    %cst_59 = arith.constant 5.000000e-01 : f32
    %180 = vector.broadcast %cst_59 : f32 to vector<8x64xf32>
    %181 = arith.addf %179, %180 : vector<8x64xf32>
    %182 = vector.extract_strided_slice %176 {offsets = [0, 64], sizes = [8, 64], strides = [1, 1]} : vector<8x256xf32> to vector<8x64xf32>
    %cst_60 = arith.constant 5.000000e-01 : f32
    %183 = vector.broadcast %cst_60 : f32 to vector<8x64xf32>
    %184 = arith.mulf %183, %182 : vector<8x64xf32>
    %cst_61 = arith.constant 5.000000e-01 : f32
    %185 = vector.broadcast %cst_61 : f32 to vector<8x64xf32>
    %186 = arith.addf %184, %185 : vector<8x64xf32>
    %187 = vector.extract_strided_slice %176 {offsets = [0, 128], sizes = [8, 64], strides = [1, 1]} : vector<8x256xf32> to vector<8x64xf32>
    %188 = vector.extract_strided_slice %176 {offsets = [0, 192], sizes = [8, 64], strides = [1, 1]} : vector<8x256xf32> to vector<8x64xf32>
    %cst_62 = arith.constant 5.000000e-01 : f32
    %189 = vector.broadcast %cst_62 : f32 to vector<8x64xf32>
    %190 = arith.mulf %189, %188 : vector<8x64xf32>
    %cst_63 = arith.constant 5.000000e-01 : f32
    %191 = vector.broadcast %cst_63 : f32 to vector<8x64xf32>
    %192 = arith.addf %190, %191 : vector<8x64xf32>
    %193 = arith.mulf %186, %142 : vector<8x64xf32>
    %194 = arith.mulf %181, %187 : vector<8x64xf32>
    %195 = arith.addf %193, %194 : vector<8x64xf32>
    %196 = math.tanh %195 : vector<8x64xf32>
    %197 = arith.mulf %192, %196 : vector<8x64xf32>
    %198 = tpu.concatenate %197, %171 in 1 : vector<8x64xf32>, vector<8x64xf32> -> vector<8x128xf32>
    %199 = arith.truncf %198 : vector<8x128xf32> to vector<8x128xbf16>
    %cst_64 = arith.constant dense<0.000000e+00> : vector<8x256xf32>
    %200 = tpu.matmul %199, %7, %cst_64 {dimension_numbers = #tpu.dot_dimension_numbers<[1], [0], [0], [1], [0, 0, 1, 1], [], []>} : vector<8x128xbf16>, vector<128x256xbf16>, vector<8x256xf32> -> vector<8x256xf32>
    %201 = vector.broadcast %8 : vector<1x256xf32> to vector<8x256xf32>
    %202 = arith.addf %200, %201 : vector<8x256xf32>
    %203 = math.tanh %202 : vector<8x256xf32>
    %204 = vector.extract_strided_slice %203 {offsets = [0, 0], sizes = [8, 64], strides = [1, 1]} : vector<8x256xf32> to vector<8x64xf32>
    %cst_65 = arith.constant 5.000000e-01 : f32
    %205 = vector.broadcast %cst_65 : f32 to vector<8x64xf32>
    %206 = arith.mulf %205, %204 : vector<8x64xf32>
    %cst_66 = arith.constant 5.000000e-01 : f32
    %207 = vector.broadcast %cst_66 : f32 to vector<8x64xf32>
    %208 = arith.addf %206, %207 : vector<8x64xf32>
    %209 = vector.extract_strided_slice %203 {offsets = [0, 64], sizes = [8, 64], strides = [1, 1]} : vector<8x256xf32> to vector<8x64xf32>
    %cst_67 = arith.constant 5.000000e-01 : f32
    %210 = vector.broadcast %cst_67 : f32 to vector<8x64xf32>
    %211 = arith.mulf %210, %209 : vector<8x64xf32>
    %cst_68 = arith.constant 5.000000e-01 : f32
    %212 = vector.broadcast %cst_68 : f32 to vector<8x64xf32>
    %213 = arith.addf %211, %212 : vector<8x64xf32>
    %214 = vector.extract_strided_slice %203 {offsets = [0, 128], sizes = [8, 64], strides = [1, 1]} : vector<8x256xf32> to vector<8x64xf32>
    %215 = vector.extract_strided_slice %203 {offsets = [0, 192], sizes = [8, 64], strides = [1, 1]} : vector<8x256xf32> to vector<8x64xf32>
    %cst_69 = arith.constant 5.000000e-01 : f32
    %216 = vector.broadcast %cst_69 : f32 to vector<8x64xf32>
    %217 = arith.mulf %216, %215 : vector<8x64xf32>
    %cst_70 = arith.constant 5.000000e-01 : f32
    %218 = vector.broadcast %cst_70 : f32 to vector<8x64xf32>
    %219 = arith.addf %217, %218 : vector<8x64xf32>
    %220 = arith.mulf %213, %169 : vector<8x64xf32>
    %221 = arith.mulf %208, %214 : vector<8x64xf32>
    %222 = arith.addf %220, %221 : vector<8x64xf32>
    %223 = math.tanh %222 : vector<8x64xf32>
    %224 = arith.mulf %219, %223 : vector<8x64xf32>
    %225 = vector.extract_strided_slice %5 {offsets = [32, 0], sizes = [8, 256], strides = [1, 1]} : vector<64x256xf32> to vector<8x256xf32>
    %226 = arith.truncf %197 : vector<8x64xf32> to vector<8x64xbf16>
    %cst_71 = arith.constant dense<0.000000e+00> : vector<8x256xf32>
    %227 = tpu.matmul %226, %6, %cst_71 {dimension_numbers = #tpu.dot_dimension_numbers<[1], [0], [0], [1], [0, 0, 1, 1], [], []>} : vector<8x64xbf16>, vector<64x256xbf16>, vector<8x256xf32> -> vector<8x256xf32>
    %228 = arith.addf %225, %227 : vector<8x256xf32>
    %229 = math.tanh %228 : vector<8x256xf32>
    %230 = vector.extract_strided_slice %229 {offsets = [0, 0], sizes = [8, 64], strides = [1, 1]} : vector<8x256xf32> to vector<8x64xf32>
    %cst_72 = arith.constant 5.000000e-01 : f32
    %231 = vector.broadcast %cst_72 : f32 to vector<8x64xf32>
    %232 = arith.mulf %231, %230 : vector<8x64xf32>
    %cst_73 = arith.constant 5.000000e-01 : f32
    %233 = vector.broadcast %cst_73 : f32 to vector<8x64xf32>
    %234 = arith.addf %232, %233 : vector<8x64xf32>
    %235 = vector.extract_strided_slice %229 {offsets = [0, 64], sizes = [8, 64], strides = [1, 1]} : vector<8x256xf32> to vector<8x64xf32>
    %cst_74 = arith.constant 5.000000e-01 : f32
    %236 = vector.broadcast %cst_74 : f32 to vector<8x64xf32>
    %237 = arith.mulf %236, %235 : vector<8x64xf32>
    %cst_75 = arith.constant 5.000000e-01 : f32
    %238 = vector.broadcast %cst_75 : f32 to vector<8x64xf32>
    %239 = arith.addf %237, %238 : vector<8x64xf32>
    %240 = vector.extract_strided_slice %229 {offsets = [0, 128], sizes = [8, 64], strides = [1, 1]} : vector<8x256xf32> to vector<8x64xf32>
    %241 = vector.extract_strided_slice %229 {offsets = [0, 192], sizes = [8, 64], strides = [1, 1]} : vector<8x256xf32> to vector<8x64xf32>
    %cst_76 = arith.constant 5.000000e-01 : f32
    %242 = vector.broadcast %cst_76 : f32 to vector<8x64xf32>
    %243 = arith.mulf %242, %241 : vector<8x64xf32>
    %cst_77 = arith.constant 5.000000e-01 : f32
    %244 = vector.broadcast %cst_77 : f32 to vector<8x64xf32>
    %245 = arith.addf %243, %244 : vector<8x64xf32>
    %246 = arith.mulf %239, %195 : vector<8x64xf32>
    %247 = arith.mulf %234, %240 : vector<8x64xf32>
    %248 = arith.addf %246, %247 : vector<8x64xf32>
    %249 = math.tanh %248 : vector<8x64xf32>
    %250 = arith.mulf %245, %249 : vector<8x64xf32>
    %251 = tpu.concatenate %250, %224 in 1 : vector<8x64xf32>, vector<8x64xf32> -> vector<8x128xf32>
    %252 = arith.truncf %251 : vector<8x128xf32> to vector<8x128xbf16>
    %cst_78 = arith.constant dense<0.000000e+00> : vector<8x256xf32>
    %253 = tpu.matmul %252, %7, %cst_78 {dimension_numbers = #tpu.dot_dimension_numbers<[1], [0], [0], [1], [0, 0, 1, 1], [], []>} : vector<8x128xbf16>, vector<128x256xbf16>, vector<8x256xf32> -> vector<8x256xf32>
    %254 = vector.broadcast %8 : vector<1x256xf32> to vector<8x256xf32>
    %255 = arith.addf %253, %254 : vector<8x256xf32>
    %256 = math.tanh %255 : vector<8x256xf32>
    %257 = vector.extract_strided_slice %256 {offsets = [0, 0], sizes = [8, 64], strides = [1, 1]} : vector<8x256xf32> to vector<8x64xf32>
    %cst_79 = arith.constant 5.000000e-01 : f32
    %258 = vector.broadcast %cst_79 : f32 to vector<8x64xf32>
    %259 = arith.mulf %258, %257 : vector<8x64xf32>
    %cst_80 = arith.constant 5.000000e-01 : f32
    %260 = vector.broadcast %cst_80 : f32 to vector<8x64xf32>
    %261 = arith.addf %259, %260 : vector<8x64xf32>
    %262 = vector.extract_strided_slice %256 {offsets = [0, 64], sizes = [8, 64], strides = [1, 1]} : vector<8x256xf32> to vector<8x64xf32>
    %cst_81 = arith.constant 5.000000e-01 : f32
    %263 = vector.broadcast %cst_81 : f32 to vector<8x64xf32>
    %264 = arith.mulf %263, %262 : vector<8x64xf32>
    %cst_82 = arith.constant 5.000000e-01 : f32
    %265 = vector.broadcast %cst_82 : f32 to vector<8x64xf32>
    %266 = arith.addf %264, %265 : vector<8x64xf32>
    %267 = vector.extract_strided_slice %256 {offsets = [0, 128], sizes = [8, 64], strides = [1, 1]} : vector<8x256xf32> to vector<8x64xf32>
    %268 = vector.extract_strided_slice %256 {offsets = [0, 192], sizes = [8, 64], strides = [1, 1]} : vector<8x256xf32> to vector<8x64xf32>
    %cst_83 = arith.constant 5.000000e-01 : f32
    %269 = vector.broadcast %cst_83 : f32 to vector<8x64xf32>
    %270 = arith.mulf %269, %268 : vector<8x64xf32>
    %cst_84 = arith.constant 5.000000e-01 : f32
    %271 = vector.broadcast %cst_84 : f32 to vector<8x64xf32>
    %272 = arith.addf %270, %271 : vector<8x64xf32>
    %273 = arith.mulf %266, %222 : vector<8x64xf32>
    %274 = arith.mulf %261, %267 : vector<8x64xf32>
    %275 = arith.addf %273, %274 : vector<8x64xf32>
    %276 = math.tanh %275 : vector<8x64xf32>
    %277 = arith.mulf %272, %276 : vector<8x64xf32>
    %278 = vector.extract_strided_slice %5 {offsets = [40, 0], sizes = [8, 256], strides = [1, 1]} : vector<64x256xf32> to vector<8x256xf32>
    %279 = arith.truncf %250 : vector<8x64xf32> to vector<8x64xbf16>
    %cst_85 = arith.constant dense<0.000000e+00> : vector<8x256xf32>
    %280 = tpu.matmul %279, %6, %cst_85 {dimension_numbers = #tpu.dot_dimension_numbers<[1], [0], [0], [1], [0, 0, 1, 1], [], []>} : vector<8x64xbf16>, vector<64x256xbf16>, vector<8x256xf32> -> vector<8x256xf32>
    %281 = arith.addf %278, %280 : vector<8x256xf32>
    %282 = math.tanh %281 : vector<8x256xf32>
    %283 = vector.extract_strided_slice %282 {offsets = [0, 0], sizes = [8, 64], strides = [1, 1]} : vector<8x256xf32> to vector<8x64xf32>
    %cst_86 = arith.constant 5.000000e-01 : f32
    %284 = vector.broadcast %cst_86 : f32 to vector<8x64xf32>
    %285 = arith.mulf %284, %283 : vector<8x64xf32>
    %cst_87 = arith.constant 5.000000e-01 : f32
    %286 = vector.broadcast %cst_87 : f32 to vector<8x64xf32>
    %287 = arith.addf %285, %286 : vector<8x64xf32>
    %288 = vector.extract_strided_slice %282 {offsets = [0, 64], sizes = [8, 64], strides = [1, 1]} : vector<8x256xf32> to vector<8x64xf32>
    %cst_88 = arith.constant 5.000000e-01 : f32
    %289 = vector.broadcast %cst_88 : f32 to vector<8x64xf32>
    %290 = arith.mulf %289, %288 : vector<8x64xf32>
    %cst_89 = arith.constant 5.000000e-01 : f32
    %291 = vector.broadcast %cst_89 : f32 to vector<8x64xf32>
    %292 = arith.addf %290, %291 : vector<8x64xf32>
    %293 = vector.extract_strided_slice %282 {offsets = [0, 128], sizes = [8, 64], strides = [1, 1]} : vector<8x256xf32> to vector<8x64xf32>
    %294 = vector.extract_strided_slice %282 {offsets = [0, 192], sizes = [8, 64], strides = [1, 1]} : vector<8x256xf32> to vector<8x64xf32>
    %cst_90 = arith.constant 5.000000e-01 : f32
    %295 = vector.broadcast %cst_90 : f32 to vector<8x64xf32>
    %296 = arith.mulf %295, %294 : vector<8x64xf32>
    %cst_91 = arith.constant 5.000000e-01 : f32
    %297 = vector.broadcast %cst_91 : f32 to vector<8x64xf32>
    %298 = arith.addf %296, %297 : vector<8x64xf32>
    %299 = arith.mulf %292, %248 : vector<8x64xf32>
    %300 = arith.mulf %287, %293 : vector<8x64xf32>
    %301 = arith.addf %299, %300 : vector<8x64xf32>
    %302 = math.tanh %301 : vector<8x64xf32>
    %303 = arith.mulf %298, %302 : vector<8x64xf32>
    %304 = tpu.concatenate %303, %277 in 1 : vector<8x64xf32>, vector<8x64xf32> -> vector<8x128xf32>
    %305 = arith.truncf %304 : vector<8x128xf32> to vector<8x128xbf16>
    %cst_92 = arith.constant dense<0.000000e+00> : vector<8x256xf32>
    %306 = tpu.matmul %305, %7, %cst_92 {dimension_numbers = #tpu.dot_dimension_numbers<[1], [0], [0], [1], [0, 0, 1, 1], [], []>} : vector<8x128xbf16>, vector<128x256xbf16>, vector<8x256xf32> -> vector<8x256xf32>
    %307 = vector.broadcast %8 : vector<1x256xf32> to vector<8x256xf32>
    %308 = arith.addf %306, %307 : vector<8x256xf32>
    %309 = math.tanh %308 : vector<8x256xf32>
    %310 = vector.extract_strided_slice %309 {offsets = [0, 0], sizes = [8, 64], strides = [1, 1]} : vector<8x256xf32> to vector<8x64xf32>
    %cst_93 = arith.constant 5.000000e-01 : f32
    %311 = vector.broadcast %cst_93 : f32 to vector<8x64xf32>
    %312 = arith.mulf %311, %310 : vector<8x64xf32>
    %cst_94 = arith.constant 5.000000e-01 : f32
    %313 = vector.broadcast %cst_94 : f32 to vector<8x64xf32>
    %314 = arith.addf %312, %313 : vector<8x64xf32>
    %315 = vector.extract_strided_slice %309 {offsets = [0, 64], sizes = [8, 64], strides = [1, 1]} : vector<8x256xf32> to vector<8x64xf32>
    %cst_95 = arith.constant 5.000000e-01 : f32
    %316 = vector.broadcast %cst_95 : f32 to vector<8x64xf32>
    %317 = arith.mulf %316, %315 : vector<8x64xf32>
    %cst_96 = arith.constant 5.000000e-01 : f32
    %318 = vector.broadcast %cst_96 : f32 to vector<8x64xf32>
    %319 = arith.addf %317, %318 : vector<8x64xf32>
    %320 = vector.extract_strided_slice %309 {offsets = [0, 128], sizes = [8, 64], strides = [1, 1]} : vector<8x256xf32> to vector<8x64xf32>
    %321 = vector.extract_strided_slice %309 {offsets = [0, 192], sizes = [8, 64], strides = [1, 1]} : vector<8x256xf32> to vector<8x64xf32>
    %cst_97 = arith.constant 5.000000e-01 : f32
    %322 = vector.broadcast %cst_97 : f32 to vector<8x64xf32>
    %323 = arith.mulf %322, %321 : vector<8x64xf32>
    %cst_98 = arith.constant 5.000000e-01 : f32
    %324 = vector.broadcast %cst_98 : f32 to vector<8x64xf32>
    %325 = arith.addf %323, %324 : vector<8x64xf32>
    %326 = arith.mulf %319, %275 : vector<8x64xf32>
    %327 = arith.mulf %314, %320 : vector<8x64xf32>
    %328 = arith.addf %326, %327 : vector<8x64xf32>
    %329 = math.tanh %328 : vector<8x64xf32>
    %330 = arith.mulf %325, %329 : vector<8x64xf32>
    %331 = vector.extract_strided_slice %5 {offsets = [48, 0], sizes = [8, 256], strides = [1, 1]} : vector<64x256xf32> to vector<8x256xf32>
    %332 = arith.truncf %303 : vector<8x64xf32> to vector<8x64xbf16>
    %cst_99 = arith.constant dense<0.000000e+00> : vector<8x256xf32>
    %333 = tpu.matmul %332, %6, %cst_99 {dimension_numbers = #tpu.dot_dimension_numbers<[1], [0], [0], [1], [0, 0, 1, 1], [], []>} : vector<8x64xbf16>, vector<64x256xbf16>, vector<8x256xf32> -> vector<8x256xf32>
    %334 = arith.addf %331, %333 : vector<8x256xf32>
    %335 = math.tanh %334 : vector<8x256xf32>
    %336 = vector.extract_strided_slice %335 {offsets = [0, 0], sizes = [8, 64], strides = [1, 1]} : vector<8x256xf32> to vector<8x64xf32>
    %cst_100 = arith.constant 5.000000e-01 : f32
    %337 = vector.broadcast %cst_100 : f32 to vector<8x64xf32>
    %338 = arith.mulf %337, %336 : vector<8x64xf32>
    %cst_101 = arith.constant 5.000000e-01 : f32
    %339 = vector.broadcast %cst_101 : f32 to vector<8x64xf32>
    %340 = arith.addf %338, %339 : vector<8x64xf32>
    %341 = vector.extract_strided_slice %335 {offsets = [0, 64], sizes = [8, 64], strides = [1, 1]} : vector<8x256xf32> to vector<8x64xf32>
    %cst_102 = arith.constant 5.000000e-01 : f32
    %342 = vector.broadcast %cst_102 : f32 to vector<8x64xf32>
    %343 = arith.mulf %342, %341 : vector<8x64xf32>
    %cst_103 = arith.constant 5.000000e-01 : f32
    %344 = vector.broadcast %cst_103 : f32 to vector<8x64xf32>
    %345 = arith.addf %343, %344 : vector<8x64xf32>
    %346 = vector.extract_strided_slice %335 {offsets = [0, 128], sizes = [8, 64], strides = [1, 1]} : vector<8x256xf32> to vector<8x64xf32>
    %347 = vector.extract_strided_slice %335 {offsets = [0, 192], sizes = [8, 64], strides = [1, 1]} : vector<8x256xf32> to vector<8x64xf32>
    %cst_104 = arith.constant 5.000000e-01 : f32
    %348 = vector.broadcast %cst_104 : f32 to vector<8x64xf32>
    %349 = arith.mulf %348, %347 : vector<8x64xf32>
    %cst_105 = arith.constant 5.000000e-01 : f32
    %350 = vector.broadcast %cst_105 : f32 to vector<8x64xf32>
    %351 = arith.addf %349, %350 : vector<8x64xf32>
    %352 = arith.mulf %345, %301 : vector<8x64xf32>
    %353 = arith.mulf %340, %346 : vector<8x64xf32>
    %354 = arith.addf %352, %353 : vector<8x64xf32>
    %355 = math.tanh %354 : vector<8x64xf32>
    %356 = arith.mulf %351, %355 : vector<8x64xf32>
    %357 = tpu.concatenate %356, %330 in 1 : vector<8x64xf32>, vector<8x64xf32> -> vector<8x128xf32>
    %358 = arith.truncf %357 : vector<8x128xf32> to vector<8x128xbf16>
    %cst_106 = arith.constant dense<0.000000e+00> : vector<8x256xf32>
    %359 = tpu.matmul %358, %7, %cst_106 {dimension_numbers = #tpu.dot_dimension_numbers<[1], [0], [0], [1], [0, 0, 1, 1], [], []>} : vector<8x128xbf16>, vector<128x256xbf16>, vector<8x256xf32> -> vector<8x256xf32>
    %360 = vector.broadcast %8 : vector<1x256xf32> to vector<8x256xf32>
    %361 = arith.addf %359, %360 : vector<8x256xf32>
    %362 = math.tanh %361 : vector<8x256xf32>
    %363 = vector.extract_strided_slice %362 {offsets = [0, 0], sizes = [8, 64], strides = [1, 1]} : vector<8x256xf32> to vector<8x64xf32>
    %cst_107 = arith.constant 5.000000e-01 : f32
    %364 = vector.broadcast %cst_107 : f32 to vector<8x64xf32>
    %365 = arith.mulf %364, %363 : vector<8x64xf32>
    %cst_108 = arith.constant 5.000000e-01 : f32
    %366 = vector.broadcast %cst_108 : f32 to vector<8x64xf32>
    %367 = arith.addf %365, %366 : vector<8x64xf32>
    %368 = vector.extract_strided_slice %362 {offsets = [0, 64], sizes = [8, 64], strides = [1, 1]} : vector<8x256xf32> to vector<8x64xf32>
    %cst_109 = arith.constant 5.000000e-01 : f32
    %369 = vector.broadcast %cst_109 : f32 to vector<8x64xf32>
    %370 = arith.mulf %369, %368 : vector<8x64xf32>
    %cst_110 = arith.constant 5.000000e-01 : f32
    %371 = vector.broadcast %cst_110 : f32 to vector<8x64xf32>
    %372 = arith.addf %370, %371 : vector<8x64xf32>
    %373 = vector.extract_strided_slice %362 {offsets = [0, 128], sizes = [8, 64], strides = [1, 1]} : vector<8x256xf32> to vector<8x64xf32>
    %374 = vector.extract_strided_slice %362 {offsets = [0, 192], sizes = [8, 64], strides = [1, 1]} : vector<8x256xf32> to vector<8x64xf32>
    %cst_111 = arith.constant 5.000000e-01 : f32
    %375 = vector.broadcast %cst_111 : f32 to vector<8x64xf32>
    %376 = arith.mulf %375, %374 : vector<8x64xf32>
    %cst_112 = arith.constant 5.000000e-01 : f32
    %377 = vector.broadcast %cst_112 : f32 to vector<8x64xf32>
    %378 = arith.addf %376, %377 : vector<8x64xf32>
    %379 = arith.mulf %372, %328 : vector<8x64xf32>
    %380 = arith.mulf %367, %373 : vector<8x64xf32>
    %381 = arith.addf %379, %380 : vector<8x64xf32>
    %382 = math.tanh %381 : vector<8x64xf32>
    %383 = arith.mulf %378, %382 : vector<8x64xf32>
    %384 = vector.extract_strided_slice %5 {offsets = [56, 0], sizes = [8, 256], strides = [1, 1]} : vector<64x256xf32> to vector<8x256xf32>
    %385 = arith.truncf %356 : vector<8x64xf32> to vector<8x64xbf16>
    %cst_113 = arith.constant dense<0.000000e+00> : vector<8x256xf32>
    %386 = tpu.matmul %385, %6, %cst_113 {dimension_numbers = #tpu.dot_dimension_numbers<[1], [0], [0], [1], [0, 0, 1, 1], [], []>} : vector<8x64xbf16>, vector<64x256xbf16>, vector<8x256xf32> -> vector<8x256xf32>
    %387 = arith.addf %384, %386 : vector<8x256xf32>
    %388 = math.tanh %387 : vector<8x256xf32>
    %389 = vector.extract_strided_slice %388 {offsets = [0, 0], sizes = [8, 64], strides = [1, 1]} : vector<8x256xf32> to vector<8x64xf32>
    %cst_114 = arith.constant 5.000000e-01 : f32
    %390 = vector.broadcast %cst_114 : f32 to vector<8x64xf32>
    %391 = arith.mulf %390, %389 : vector<8x64xf32>
    %cst_115 = arith.constant 5.000000e-01 : f32
    %392 = vector.broadcast %cst_115 : f32 to vector<8x64xf32>
    %393 = arith.addf %391, %392 : vector<8x64xf32>
    %394 = vector.extract_strided_slice %388 {offsets = [0, 64], sizes = [8, 64], strides = [1, 1]} : vector<8x256xf32> to vector<8x64xf32>
    %cst_116 = arith.constant 5.000000e-01 : f32
    %395 = vector.broadcast %cst_116 : f32 to vector<8x64xf32>
    %396 = arith.mulf %395, %394 : vector<8x64xf32>
    %cst_117 = arith.constant 5.000000e-01 : f32
    %397 = vector.broadcast %cst_117 : f32 to vector<8x64xf32>
    %398 = arith.addf %396, %397 : vector<8x64xf32>
    %399 = vector.extract_strided_slice %388 {offsets = [0, 128], sizes = [8, 64], strides = [1, 1]} : vector<8x256xf32> to vector<8x64xf32>
    %400 = vector.extract_strided_slice %388 {offsets = [0, 192], sizes = [8, 64], strides = [1, 1]} : vector<8x256xf32> to vector<8x64xf32>
    %cst_118 = arith.constant 5.000000e-01 : f32
    %401 = vector.broadcast %cst_118 : f32 to vector<8x64xf32>
    %402 = arith.mulf %401, %400 : vector<8x64xf32>
    %cst_119 = arith.constant 5.000000e-01 : f32
    %403 = vector.broadcast %cst_119 : f32 to vector<8x64xf32>
    %404 = arith.addf %402, %403 : vector<8x64xf32>
    %405 = arith.mulf %398, %354 : vector<8x64xf32>
    %406 = arith.mulf %393, %399 : vector<8x64xf32>
    %407 = arith.addf %405, %406 : vector<8x64xf32>
    %408 = math.tanh %407 : vector<8x64xf32>
    %409 = arith.mulf %404, %408 : vector<8x64xf32>
    %410 = tpu.concatenate %409, %383 in 1 : vector<8x64xf32>, vector<8x64xf32> -> vector<8x128xf32>
    %411 = arith.truncf %410 : vector<8x128xf32> to vector<8x128xbf16>
    %cst_120 = arith.constant dense<0.000000e+00> : vector<8x256xf32>
    %412 = tpu.matmul %411, %7, %cst_120 {dimension_numbers = #tpu.dot_dimension_numbers<[1], [0], [0], [1], [0, 0, 1, 1], [], []>} : vector<8x128xbf16>, vector<128x256xbf16>, vector<8x256xf32> -> vector<8x256xf32>
    %413 = vector.broadcast %8 : vector<1x256xf32> to vector<8x256xf32>
    %414 = arith.addf %412, %413 : vector<8x256xf32>
    %415 = math.tanh %414 : vector<8x256xf32>
    %416 = vector.extract_strided_slice %415 {offsets = [0, 0], sizes = [8, 64], strides = [1, 1]} : vector<8x256xf32> to vector<8x64xf32>
    %cst_121 = arith.constant 5.000000e-01 : f32
    %417 = vector.broadcast %cst_121 : f32 to vector<8x64xf32>
    %418 = arith.mulf %417, %416 : vector<8x64xf32>
    %cst_122 = arith.constant 5.000000e-01 : f32
    %419 = vector.broadcast %cst_122 : f32 to vector<8x64xf32>
    %420 = arith.addf %418, %419 : vector<8x64xf32>
    %421 = vector.extract_strided_slice %415 {offsets = [0, 64], sizes = [8, 64], strides = [1, 1]} : vector<8x256xf32> to vector<8x64xf32>
    %cst_123 = arith.constant 5.000000e-01 : f32
    %422 = vector.broadcast %cst_123 : f32 to vector<8x64xf32>
    %423 = arith.mulf %422, %421 : vector<8x64xf32>
    %cst_124 = arith.constant 5.000000e-01 : f32
    %424 = vector.broadcast %cst_124 : f32 to vector<8x64xf32>
    %425 = arith.addf %423, %424 : vector<8x64xf32>
    %426 = vector.extract_strided_slice %415 {offsets = [0, 128], sizes = [8, 64], strides = [1, 1]} : vector<8x256xf32> to vector<8x64xf32>
    %427 = vector.extract_strided_slice %415 {offsets = [0, 192], sizes = [8, 64], strides = [1, 1]} : vector<8x256xf32> to vector<8x64xf32>
    %cst_125 = arith.constant 5.000000e-01 : f32
    %428 = vector.broadcast %cst_125 : f32 to vector<8x64xf32>
    %429 = arith.mulf %428, %427 : vector<8x64xf32>
    %cst_126 = arith.constant 5.000000e-01 : f32
    %430 = vector.broadcast %cst_126 : f32 to vector<8x64xf32>
    %431 = arith.addf %429, %430 : vector<8x64xf32>
    %432 = arith.mulf %425, %381 : vector<8x64xf32>
    %433 = arith.mulf %420, %426 : vector<8x64xf32>
    %434 = arith.addf %432, %433 : vector<8x64xf32>
    %435 = math.tanh %434 : vector<8x64xf32>
    %436 = arith.mulf %431, %435 : vector<8x64xf32>
    %437 = arith.truncf %436 : vector<8x64xf32> to vector<8x64xbf16>
    %c0_127 = arith.constant 0 : index
    %c0_128 = arith.constant 0 : index
    %438 = vector.load %arg6[%c0_127, %c0_128] : memref<64x128xbf16, #tpu.memory_space<vmem>>, vector<64x128xbf16>
    %cst_129 = arith.constant dense<0.000000e+00> : vector<8x128xf32>
    %439 = tpu.matmul %437, %438, %cst_129 {dimension_numbers = #tpu.dot_dimension_numbers<[1], [0], [0], [1], [0, 0, 1, 1], [], []>} : vector<8x64xbf16>, vector<64x128xbf16>, vector<8x128xf32> -> vector<8x128xf32>
    %c0_130 = arith.constant 0 : index
    %c0_131 = arith.constant 0 : index
    %440 = vector.load %arg7[%c0_130, %c0_131] : memref<1x128xf32, #tpu.memory_space<vmem>>, vector<1x128xf32>
    %441 = vector.broadcast %440 : vector<1x128xf32> to vector<8x128xf32>
    %442 = arith.addf %439, %441 : vector<8x128xf32>
    %c0_132 = arith.constant 0 : index
    %c0_133 = arith.constant 0 : index
    %443 = vector.load %arg8[%c0_132, %c0_133] : memref<8x128xf32, #tpu.memory_space<vmem>>, vector<8x128xf32>
    tpu.vector_store %arg8[%c0_132, %c0_133], %442 {strides = array<i32>} : memref<8x128xf32, #tpu.memory_space<vmem>>, vector<8x128xf32>,
    return
  }
}

</mosaic_0001>

<llo_original>
// kernel: tpu_custom_call.1
$region0: #{tpu_custom_call.1}
  #allocation0 [shape = 'u32[]', space=smem, size = 0x4, offset = 0x4, fixed_abs, tag = 'smem constant byte address 0x4 - core index']
  #allocation1 [shape = 'u32[144,128]{1,0:T(1,128)}', space=vmem, size = 0x12000, scoped, tag = 'internal scratch']
  %s0 = inlined_call_operand.vmem [shape: bf16[64,8], index: 0, kind: input, shape index: {}]
  %s1 = inlined_call_operand.vmem [shape: bf16[8,256], index: 1, kind: input, shape index: {}]
  %s2 = inlined_call_operand.vmem [shape: f32[1,256], index: 2, kind: input, shape index: {}]
  %s3 = inlined_call_operand.hbm [shape: bf16[64,256], index: 3, kind: input, shape index: {}]
  %s4 = inlined_call_operand.hbm [shape: bf16[128,256], index: 4, kind: input, shape index: {}]
  %s5 = inlined_call_operand.vmem [shape: f32[1,256], index: 5, kind: input, shape index: {}]
  %s6 = inlined_call_operand.vmem [shape: bf16[64,128], index: 6, kind: input, shape index: {}]
  %s7 = inlined_call_operand.vmem [shape: f32[1,128], index: 7, kind: input, shape index: {}]
  %s8 = inlined_call_operand.hbm [shape: f32[8,128], index: 8, kind: output, shape index: {}]
  %s9 = sld [smem:[#allocation0]]
  $region50: #{tpu_custom_call.1} parent=0
    _
  %s11 = ssub.s32 1, %s9
  %s12 = scalar_select 0, %s11, %s9
  $region1: #{tpu_custom_call.1} parent=0
    #allocation2 [shape = 'u8[32768]{0}', space=vmem, size = 0x8000, scoped, tag = 'input window, operand 3, single buffered']
    #allocation3 [shape = 's32[1]{0}', space=sflag, size = 0x4, scoped, tag = 'scoped memory for tpu_custom_call.1']
    #allocation4 [shape = 's32[1]{0}', space=sflag, size = 0x4, scoped, tag = 'scoped memory for tpu_custom_call.1']
    #allocation5 [shape = 'u8[65536]{0}', space=vmem, size = 0x10000, scoped, tag = 'input window, operand 4, single buffered']
    #allocation6 [shape = 's32[1]{0}', space=sflag, size = 0x4, scoped, tag = 'scoped memory for tpu_custom_call.1']
    #allocation7 [shape = 'u8[4096]{0}', space=vmem, size = 0x1000, scoped, tag = 'output window, operand 0, single buffered']
    %13 = vsyncpa [#allocation3], 0
    %14 = vsyncpa [#allocation6], 0
    %15 = vsyncpa [#allocation4], 0
    // Predicated region
    $region2: #{tpu_custom_call.1} parent=1 // pred_check
      _
    $region3: #{tpu_custom_call.1} parent=1 // pred_check_branch
      %17 = sbr.rel (0) target = $region5
    $region4: #{tpu_custom_call.1} parent=1 // pred_region
      _
    $region5: #{tpu_custom_call.1} parent=1 // pred_fallthru
      _
    // Predicated region
    $region6: #{tpu_custom_call.1} parent=1 // pred_check
      _
    $region7: #{tpu_custom_call.1} parent=1 // pred_check_branch
      %19 = sbr.rel (0) target = $region9
    $region8: #{tpu_custom_call.1} parent=1 // pred_region
      _
    $region9: #{tpu_custom_call.1} parent=1 // pred_fallthru
      _
    // Predicated region
    $region10: #{tpu_custom_call.1} parent=1 // pred_check
      _
    $region11: #{tpu_custom_call.1} parent=1 // pred_check_branch
      %21 = sbr.rel (0) target = $region13
    $region12: #{tpu_custom_call.1} parent=1 // pred_region
      _
    $region13: #{tpu_custom_call.1} parent=1 // pred_fallthru
      _
    // Predicated region
    $region14: #{tpu_custom_call.1} parent=1 // pred_check
      _
    $region15: #{tpu_custom_call.1} parent=1 // pred_check_branch
      %23 = sbr.rel (0) target = $region17
    $region16: #{tpu_custom_call.1} parent=1 // pred_region
      %s25 = ssub.s32 1024, 1024
      %26 = vsyncadd [#allocation3], %s25
      %s27 = sshll.u32 [#allocation2], 4
      %s28 = int_to_ptr.vmem [resolvable:$true] %s27
      %33 = dma.hbm_to_vmem [thread:$0]  %s3, 1024, %s28, [#allocation3], 128, 128, 8
    $region17: #{tpu_custom_call.1} parent=1 // pred_fallthru
      _
    // Predicated region
    $region18: #{tpu_custom_call.1} parent=1 // pred_check
      _
    $region19: #{tpu_custom_call.1} parent=1 // pred_check_branch
      %35 = sbr.rel (0) target = $region21
    $region20: #{tpu_custom_call.1} parent=1 // pred_region
      %s37 = ssub.s32 2048, 2048
      %38 = vsyncadd [#allocation6], %s37
      %s39 = sshll.u32 [#allocation5], 4
      %s40 = int_to_ptr.vmem [resolvable:$true] %s39
      %45 = dma.hbm_to_vmem [thread:$0]  %s4, 2048, %s40, [#allocation6], 128, 128, 8
    $region21: #{tpu_custom_call.1} parent=1 // pred_fallthru
      _
    // Predicated region
    $region22: #{tpu_custom_call.1} parent=1 // pred_check
      _
    $region23: #{tpu_custom_call.1} parent=1 // pred_check_branch
      %47 = sbr.rel (0) target = $region25
    $region24: #{tpu_custom_call.1} parent=1 // pred_region
      _
    $region25: #{tpu_custom_call.1} parent=1 // pred_fallthru
      _
    // Predicated region
    $region26: #{tpu_custom_call.1} parent=1 // pred_check
      _
    $region27: #{tpu_custom_call.1} parent=1 // pred_check_branch
      %49 = sbr.rel (0) target = $region29
    $region28: #{tpu_custom_call.1} parent=1 // pred_region
      _
    $region29: #{tpu_custom_call.1} parent=1 // pred_fallthru
      _
    // Predicated region
    $region30: #{tpu_custom_call.1} parent=1 // pred_check
      _
    $region31: #{tpu_custom_call.1} parent=1 // pred_check_branch
      %51 = sbr.rel (0) target = $region33
    $region32: #{tpu_custom_call.1} parent=1 // pred_region
      _
    $region33: #{tpu_custom_call.1} parent=1 // pred_fallthru
      _
    // Predicated region
    $region34: #{tpu_custom_call.1} parent=1 // pred_check
      _
    $region35: #{tpu_custom_call.1} parent=1 // pred_check_branch
      %53 = sbr.rel (0) target = $region37
    $region36: #{tpu_custom_call.1} parent=1 // pred_region
      %54 = dma.done [#allocation3], 1024
    $region37: #{tpu_custom_call.1} parent=1 // pred_fallthru
      _
    // Predicated region
    $region38: #{tpu_custom_call.1} parent=1 // pred_check
      _
    $region39: #{tpu_custom_call.1} parent=1 // pred_check_branch
      %56 = sbr.rel (0) target = $region41
    $region40: #{tpu_custom_call.1} parent=1 // pred_region
      %57 = dma.done [#allocation6], 2048
    $region41: #{tpu_custom_call.1} parent=1 // pred_fallthru
      _
    %v59 = vld [vmem:[%s0] sm:$0xf]
    %v60 = vld [vmem:[%s0 + $0x4] sm:$0xf]
    %v61 = vld [vmem:[%s0 + $0x8] sm:$0xf]
    %v62 = vld [vmem:[%s0 + $0xc] sm:$0xf]
    %v63 = vld [vmem:[%s0 + $0x10] sm:$0xf]
    %v64 = vld [vmem:[%s0 + $0x14] sm:$0xf]
    %v65 = vld [vmem:[%s0 + $0x18] sm:$0xf]
    %v66 = vld [vmem:[%s0 + $0x1c] sm:$0xf]
    %v67 = vld [vmem:[%s1] sm:$0xff]
    %v68 = vld [vmem:[%s2] sm:$0x3]
    %v70 = vlaneseq
    %v71 = vshrl.u32 %v70, 7
    %v72 = vsub.s32 0, %v71
    %v73 = vrot.slane %v68, %v72
    %v74 = vlaneseq
    %v75 = vshrl.u32 %v74, 7
    %v76 = vsub.s32 1, %v75
    %v77 = vrot.slane %v68, %v76
    %v88 = vunpack.c.l.b16 %v59
    %v89 = vunpack.c.l.b16 %v60
    %v90 = vunpack.c.l.b16 %v61
    %v91 = vunpack.c.l.b16 %v62
    %v92 = vunpack.c.l.b16 %v63
    %v93 = vunpack.c.l.b16 %v64
    %v94 = vunpack.c.l.b16 %v65
    %v95 = vunpack.c.l.b16 %v66
    %v96 = vpack.c.b16 %v89, %v88
    %v97 = vpack.c.b16 %v91, %v90
    %v98 = vpack.c.b16 %v93, %v92
    %v99 = vpack.c.b16 %v95, %v94
    %v101 = vunpack.c.l.b16 %v67
    %v102 = vunpack.c.h.b16 %v67
    %v103 = vpack.c.b16 %v101, %v101
    %v104 = vpack.c.b16 %v102, %v102
    %vm105 = vcmask 64512
    %v107 = vsel %vm105, %v96, 0
    %v110 = vsel %vm105, %v97, 0
    %v113 = vsel %vm105, %v98, 0
    %v116 = vsel %vm105, %v99, 0
    %vm118 = vcmask 1043456
    %v120 = vsel %vm118, %v103, 0
    %v123 = vsel %vm118, %v104, 0
    %125 = vmatprep.subr.bf16.mxu0 %v123
    %126 = vmatpush1.bf16.msra.mxu0 %v120
    %127 = vmatprep.subr.bf16.mxu0 0
    %128 = vmatpush1.bf16.msra.mxu0 0
    %129 = vmatprep.subr.bf16.mxu0 0
    %130 = vmatpush1.bf16.msra.mxu0 0
    %131 = vmatprep.subr.bf16.mxu0 0
    %132 = vmatpush1.bf16.msra.mxu0 0
    %133 = vmatprep.subr.bf16.mxu0 0
    %134 = vmatpush1.bf16.msra.mxu0 0
    %135 = vmatprep.subr.bf16.mxu0 0
    %136 = vmatpush1.bf16.msra.mxu0 0
    %137 = vmatprep.subr.bf16.mxu0 0
    %138 = vmatpush1.bf16.msra.mxu0 0
    %139 = vmatprep.subr.bf16.mxu0 0
    %140 = vmatpush1.bf16.msra.mxu0 0
    %141 = vmatprep.subr.bf16.mxu0 0
    %142 = vmatpush1.bf16.msra.mxu0 0
    %143 = vmatprep.subr.bf16.mxu0 0
    %144 = vmatpush1.bf16.msra.mxu0 0
    %145 = vmatprep.subr.bf16.mxu0 0
    %146 = vmatpush1.bf16.msra.mxu0 0
    %147 = vmatprep.subr.bf16.mxu0 0
    %148 = vmatpush1.bf16.msra.mxu0 0
    %149 = vmatprep.subr.bf16.mxu0 0
    %150 = vmatpush1.bf16.msra.mxu0 0
    %151 = vmatprep.subr.bf16.mxu0 0
    %152 = vmatpush1.bf16.msra.mxu0 0
    %153 = vmatprep.subr.bf16.mxu0 0
    %154 = vmatpush1.bf16.msra.mxu0 0
    %155 = vmatprep.subr.bf16.mxu0 0
    %156 = vmatpush1.bf16.msra.mxu0 0
    %157 = vmatprep.mubr.bf16.mxu0 0
    %158 = vmatmul.mubr.bf16.gmra.mrb[0].mxu0 %v107
    %v159 = vpop.f32.mrb[0].mxu0
    %v160 = vadd.f32 %v73, %v159
    %v161 = vpop.f32.mrb[0].mxu0
    %v162 = vadd.f32 %v77, %v161
    %v163 = vpop.f32.mrb[0].mxu0
    %v164 = vadd.f32 %v73, %v163
    %v165 = vpop.f32.mrb[0].mxu0
    %v166 = vadd.f32 %v77, %v165
    %167 = vmatprep.mubr.bf16.mxu0 0
    %168 = vmatmul.mubr.bf16.gmra.mrb[0].mxu0 %v110
    %v169 = vpop.f32.mrb[0].mxu0
    %v170 = vadd.f32 %v73, %v169
    %v171 = vpop.f32.mrb[0].mxu0
    %v172 = vadd.f32 %v77, %v171
    %v173 = vpop.f32.mrb[0].mxu0
    %v174 = vadd.f32 %v73, %v173
    %v175 = vpop.f32.mrb[0].mxu0
    %v176 = vadd.f32 %v77, %v175
    %177 = vmatprep.mubr.bf16.mxu0 0
    %178 = vmatmul.mubr.bf16.gmra.mrb[0].mxu0 %v113
    %v179 = vpop.f32.mrb[0].mxu0
    %v180 = vadd.f32 %v73, %v179
    %v181 = vpop.f32.mrb[0].mxu0
    %v182 = vadd.f32 %v77, %v181
    %v183 = vpop.f32.mrb[0].mxu0
    %v184 = vadd.f32 %v73, %v183
    %v185 = vpop.f32.mrb[0].mxu0
    %v186 = vadd.f32 %v77, %v185
    %187 = vmatprep.mubr.bf16.mxu0 0
    %188 = vmatmul.mubr.bf16.gmra.mrb[0].mxu0 %v116
    %v189 = vpop.f32.mrb[0].mxu0
    %v190 = vadd.f32 %v73, %v189
    %v191 = vpop.f32.mrb[0].mxu0
    %v192 = vadd.f32 %v77, %v191
    %v193 = vpop.f32.mrb[0].mxu0
    %v194 = vadd.f32 %v73, %v193
    %v195 = vpop.f32.mrb[0].mxu0
    %v196 = vadd.f32 %v77, %v195
    %197 = vdwg.mxu0
    %v198 = vld [vmem:[#allocation2] sm:$0xff]
    %v199 = vld [vmem:[#allocation2 + $0x8] sm:$0xff]
    %v200 = vld [vmem:[#allocation2 + $0x10] sm:$0xff]
    %v201 = vld [vmem:[#allocation2 + $0x18] sm:$0xff]
    %v202 = vld [vmem:[#allocation2 + $0x20] sm:$0xff]
    %v203 = vld [vmem:[#allocation2 + $0x28] sm:$0xff]
    %v204 = vld [vmem:[#allocation2 + $0x30] sm:$0xff]
    %v205 = vld [vmem:[#allocation2 + $0x38] sm:$0xff]
    %v206 = vld [vmem:[#allocation5] sm:$0xff]
    %v207 = vld [vmem:[#allocation5 + $0x8] sm:$0xff]
    %v208 = vld [vmem:[#allocation5 + $0x10] sm:$0xff]
    %v209 = vld [vmem:[#allocation5 + $0x18] sm:$0xff]
    %v210 = vld [vmem:[#allocation5 + $0x20] sm:$0xff]
    %v211 = vld [vmem:[#allocation5 + $0x28] sm:$0xff]
    %v212 = vld [vmem:[#allocation5 + $0x30] sm:$0xff]
    %v213 = vld [vmem:[#allocation5 + $0x38] sm:$0xff]
    %v214 = vld [vmem:[#allocation5 + $0x40] sm:$0xff]
    %v215 = vld [vmem:[#allocation5 + $0x48] sm:$0xff]
    %v216 = vld [vmem:[#allocation5 + $0x50] sm:$0xff]
    %v217 = vld [vmem:[#allocation5 + $0x58] sm:$0xff]
    %v218 = vld [vmem:[#allocation5 + $0x60] sm:$0xff]
    %v219 = vld [vmem:[#allocation5 + $0x68] sm:$0xff]
    %v220 = vld [vmem:[#allocation5 + $0x70] sm:$0xff]
    %v221 = vld [vmem:[#allocation5 + $0x78] sm:$0xff]
    %v222 = vld [vmem:[%s5] sm:$0x3]
    %v231 = vunpack.c.l.b16 %v198
    %v232 = vunpack.c.h.b16 %v198
    %v233 = vunpack.c.l.b16 %v199
    %v234 = vunpack.c.h.b16 %v199
    %v235 = vunpack.c.l.b16 %v200
    %v236 = vunpack.c.h.b16 %v200
    %v237 = vunpack.c.l.b16 %v201
    %v238 = vunpack.c.h.b16 %v201
    %v239 = vunpack.c.l.b16 %v202
    %v240 = vunpack.c.h.b16 %v202
    %v241 = vunpack.c.l.b16 %v203
    %v242 = vunpack.c.h.b16 %v203
    %v243 = vunpack.c.l.b16 %v204
    %v244 = vunpack.c.h.b16 %v204
    %v245 = vunpack.c.l.b16 %v205
    %v246 = vunpack.c.h.b16 %v205
    %v247 = vpack.c.b16 %v233, %v231
    %v248 = vpack.c.b16 %v234, %v232
    %v249 = vpack.c.b16 %v237, %v235
    %v250 = vpack.c.b16 %v238, %v236
    %v251 = vpack.c.b16 %v241, %v239
    %v252 = vpack.c.b16 %v242, %v240
    %v253 = vpack.c.b16 %v245, %v243
    %v254 = vpack.c.b16 %v246, %v244
    %vm263 = vcmask 523264
    %v265 = vsel %vm263, 0, 0
    %267 = vmatprep.subr.bf16.mxu0 %v248
    %268 = vmatpush1.bf16.msra.mxu0 %v247
    %269 = vmatprep.subr.bf16.mxu0 %v250
    %270 = vmatpush1.bf16.msra.mxu0 %v249
    %271 = vmatprep.subr.bf16.mxu0 %v252
    %272 = vmatpush1.bf16.msra.mxu0 %v251
    %273 = vmatprep.subr.bf16.mxu0 %v254
    %274 = vmatpush1.bf16.msra.mxu0 %v253
    %275 = vmatprep.subr.bf16.mxu0 0
    %276 = vmatpush1.bf16.msra.mxu0 0
    %277 = vmatprep.subr.bf16.mxu0 0
    %278 = vmatpush1.bf16.msra.mxu0 0
    %279 = vmatprep.subr.bf16.mxu0 0
    %280 = vmatpush1.bf16.msra.mxu0 0
    %281 = vmatprep.subr.bf16.mxu0 0
    %282 = vmatpush1.bf16.msra.mxu0 0
    %283 = vmatprep.subr.bf16.mxu0 0
    %284 = vmatpush1.bf16.msra.mxu0 0
    %285 = vmatprep.subr.bf16.mxu0 0
    %286 = vmatpush1.bf16.msra.mxu0 0
    %287 = vmatprep.subr.bf16.mxu0 0
    %288 = vmatpush1.bf16.msra.mxu0 0
    %289 = vmatprep.subr.bf16.mxu0 0
    %290 = vmatpush1.bf16.msra.mxu0 0
    %291 = vmatprep.subr.bf16.mxu0 0
    %292 = vmatpush1.bf16.msra.mxu0 0
    %293 = vmatprep.subr.bf16.mxu0 0
    %294 = vmatpush1.bf16.msra.mxu0 0
    %295 = vmatprep.subr.bf16.mxu0 0
    %296 = vmatpush1.bf16.msra.mxu0 0
    %297 = vmatprep.subr.bf16.mxu0 0
    %298 = vmatpush1.bf16.msra.mxu0 0
    %299 = vmatprep.mubr.bf16.mxu0 0
    %300 = vmatmul.mubr.bf16.gmra.mrb[0].mxu0 %v265
    %v301 = vpop.f32.mrb[0].mxu0
    %v302 = vadd.f32 0.0, %v301
    %v303 = vpop.f32.mrb[0].mxu0
    %v304 = vadd.f32 0.0, %v303
    %v305 = vpop.f32.mrb[0].mxu0
    %v306 = vpop.f32.mrb[0].mxu0
    %307 = vdwg.mxu0
    %v308 = vadd.f32 %v160, %v302
    %v309 = vadd.f32 %v162, %v304
    %v310 = vtanh.pop %v308
    %v311 = vtanh.pop %v309
    %v312 = vmul.f32 %v310, 0.5
    %v313 = vadd.f32 %v312, 0.5
    %v314 = vmul.f32 %v311, 0.5
    %v315 = vadd.f32 %v314, 0.5
    %v316 = vmul.f32 %v313, 0.0
    %v317 = vmul.f32 %v313, %v311
    %319 = vrot.lane.b32.xlu0 %v317, 64
    %v320 = vpop.permute.xlu0 %319
    %v322 = vadd.f32 %v316, %v320
    %v323 = vtanh.pop %v322
    %v324 = vmul.f32 %v315, %v323
    %326 = vrot.lane.b32.xlu0 %v324, 64
    %v327 = vpop.permute.xlu0 %326
    %v329 = vsel %vm263, %v327, 0.0
    %v330 = vpack.c.bf16 %v329, %v329
    %v332 = vlaneseq
    %v333 = vshrl.u32 %v332, 7
    %v334 = vsub.s32 0, %v333
    %v335 = vrot.slane %v222, %v334
    %v336 = vlaneseq
    %v337 = vshrl.u32 %v336, 7
    %v338 = vsub.s32 1, %v337
    %v339 = vrot.slane %v222, %v338
    %v358 = vunpack.c.l.b16 %v206
    %v359 = vunpack.c.h.b16 %v206
    %v360 = vunpack.c.l.b16 %v207
    %v361 = vunpack.c.h.b16 %v207
    %v362 = vunpack.c.l.b16 %v208
    %v363 = vunpack.c.h.b16 %v208
    %v364 = vunpack.c.l.b16 %v209
    %v365 = vunpack.c.h.b16 %v209
    %v366 = vunpack.c.l.b16 %v210
    %v367 = vunpack.c.h.b16 %v210
    %v368 = vunpack.c.l.b16 %v211
    %v369 = vunpack.c.h.b16 %v211
    %v370 = vunpack.c.l.b16 %v212
    %v371 = vunpack.c.h.b16 %v212
    %v372 = vunpack.c.l.b16 %v213
    %v373 = vunpack.c.h.b16 %v213
    %v374 = vunpack.c.l.b16 %v214
    %v375 = vunpack.c.h.b16 %v214
    %v376 = vunpack.c.l.b16 %v215
    %v377 = vunpack.c.h.b16 %v215
    %v378 = vunpack.c.l.b16 %v216
    %v379 = vunpack.c.h.b16 %v216
    %v380 = vunpack.c.l.b16 %v217
    %v381 = vunpack.c.h.b16 %v217
    %v382 = vunpack.c.l.b16 %v218
    %v383 = vunpack.c.h.b16 %v218
    %v384 = vunpack.c.l.b16 %v219
    %v385 = vunpack.c.h.b16 %v219
    %v386 = vunpack.c.l.b16 %v220
    %v387 = vunpack.c.h.b16 %v220
    %v388 = vunpack.c.l.b16 %v221
    %v389 = vunpack.c.h.b16 %v221
    %v390 = vpack.c.b16 %v360, %v358
    %v391 = vpack.c.b16 %v361, %v359
    %v392 = vpack.c.b16 %v364, %v362
    %v393 = vpack.c.b16 %v365, %v363
    %v394 = vpack.c.b16 %v368, %v366
    %v395 = vpack.c.b16 %v369, %v367
    %v396 = vpack.c.b16 %v372, %v370
    %v397 = vpack.c.b16 %v373, %v371
    %v398 = vpack.c.b16 %v376, %v374
    %v399 = vpack.c.b16 %v377, %v375
    %v400 = vpack.c.b16 %v380, %v378
    %v401 = vpack.c.b16 %v381, %v379
    %v402 = vpack.c.b16 %v384, %v382
    %v403 = vpack.c.b16 %v385, %v383
    %v404 = vpack.c.b16 %v388, %v386
    %v405 = vpack.c.b16 %v389, %v387
    %422 = vmatprep.subr.bf16.mxu0 %v391
    %423 = vmatpush1.bf16.msra.mxu0 %v390
    %424 = vmatprep.subr.bf16.mxu0 %v393
    %425 = vmatpush1.bf16.msra.mxu0 %v392
    %426 = vmatprep.subr.bf16.mxu0 %v395
    %427 = vmatpush1.bf16.msra.mxu0 %v394
    %428 = vmatprep.subr.bf16.mxu0 %v397
    %429 = vmatpush1.bf16.msra.mxu0 %v396
    %430 = vmatprep.subr.bf16.mxu0 %v399
    %431 = vmatpush1.bf16.msra.mxu0 %v398
    %432 = vmatprep.subr.bf16.mxu0 %v401
    %433 = vmatpush1.bf16.msra.mxu0 %v400
    %434 = vmatprep.subr.bf16.mxu0 %v403
    %435 = vmatpush1.bf16.msra.mxu0 %v402
    %436 = vmatprep.subr.bf16.mxu0 %v405
    %437 = vmatpush1.bf16.msra.mxu0 %v404
    %438 = vmatprep.subr.bf16.mxu0 0
    %439 = vmatpush1.bf16.msra.mxu0 0
    %440 = vmatprep.subr.bf16.mxu0 0
    %441 = vmatpush1.bf16.msra.mxu0 0
    %442 = vmatprep.subr.bf16.mxu0 0
    %443 = vmatpush1.bf16.msra.mxu0 0
    %444 = vmatprep.subr.bf16.mxu0 0
    %445 = vmatpush1.bf16.msra.mxu0 0
    %446 = vmatprep.subr.bf16.mxu0 0
    %447 = vmatpush1.bf16.msra.mxu0 0
    %448 = vmatprep.subr.bf16.mxu0 0
    %449 = vmatpush1.bf16.msra.mxu0 0
    %450 = vmatprep.subr.bf16.mxu0 0
    %451 = vmatpush1.bf16.msra.mxu0 0
    %452 = vmatprep.subr.bf16.mxu0 0
    %453 = vmatpush1.bf16.msra.mxu0 0
    %454 = vmatprep.mubr.bf16.mxu0 0
    %455 = vmatmul.mubr.bf16.gmra.mrb[0].mxu0 %v330
    %v456 = vpop.f32.mrb[0].mxu0
    %v457 = vadd.f32 %v335, %v456
    %v458 = vpop.f32.mrb[0].mxu0
    %v459 = vadd.f32 %v339, %v458
    %v460 = vpop.f32.mrb[0].mxu0
    %v461 = vpop.f32.mrb[0].mxu0
    %462 = vdwg.mxu0
    %v463 = vtanh.pop %v457
    %v464 = vtanh.pop %v459
    %v465 = vmul.f32 %v463, 0.5
    %v466 = vadd.f32 %v465, 0.5
    %v467 = vmul.f32 %v464, 0.5
    %v468 = vadd.f32 %v467, 0.5
    %v469 = vmul.f32 %v466, 0.0
    %v470 = vmul.f32 %v466, %v464
    %472 = vrot.lane.b32.xlu0 %v470, 64
    %v473 = vpop.permute.xlu0 %472
    %v475 = vadd.f32 %v469, %v473
    %v476 = vtanh.pop %v475
    %v477 = vmul.f32 %v468, %v476
    %v478 = vpack.c.bf16 %v324, %v324
    %480 = vrot.lane.b32.xlu0 %v478, 64
    %v481 = vpop.permute.xlu0 %480
    %v483 = vsel %vm263, %v481, 0
    %485 = vmatprep.subr.bf16.mxu0 %v248
    %486 = vmatpush1.bf16.msra.mxu0 %v247
    %487 = vmatprep.subr.bf16.mxu0 %v250
    %488 = vmatpush1.bf16.msra.mxu0 %v249
    %489 = vmatprep.subr.bf16.mxu0 %v252
    %490 = vmatpush1.bf16.msra.mxu0 %v251
    %491 = vmatprep.subr.bf16.mxu0 %v254
    %492 = vmatpush1.bf16.msra.mxu0 %v253
    %493 = vmatprep.subr.bf16.mxu0 0
    %494 = vmatpush1.bf16.msra.mxu0 0
    %495 = vmatprep.subr.bf16.mxu0 0
    %496 = vmatpush1.bf16.msra.mxu0 0
    %497 = vmatprep.subr.bf16.mxu0 0
    %498 = vmatpush1.bf16.msra.mxu0 0
    %499 = vmatprep.subr.bf16.mxu0 0
    %500 = vmatpush1.bf16.msra.mxu0 0
    %501 = vmatprep.subr.bf16.mxu0 0
    %502 = vmatpush1.bf16.msra.mxu0 0
    %503 = vmatprep.subr.bf16.mxu0 0
    %504 = vmatpush1.bf16.msra.mxu0 0
    %505 = vmatprep.subr.bf16.mxu0 0
    %506 = vmatpush1.bf16.msra.mxu0 0
    %507 = vmatprep.subr.bf16.mxu0 0
    %508 = vmatpush1.bf16.msra.mxu0 0
    %509 = vmatprep.subr.bf16.mxu0 0
    %510 = vmatpush1.bf16.msra.mxu0 0
    %511 = vmatprep.subr.bf16.mxu0 0
    %512 = vmatpush1.bf16.msra.mxu0 0
    %513 = vmatprep.subr.bf16.mxu0 0
    %514 = vmatpush1.bf16.msra.mxu0 0
    %515 = vmatprep.subr.bf16.mxu0 0
    %516 = vmatpush1.bf16.msra.mxu0 0
    %517 = vmatprep.mubr.bf16.mxu0 0
    %518 = vmatmul.mubr.bf16.gmra.mrb[0].mxu0 %v483
    %v519 = vpop.f32.mrb[0].mxu0
    %v520 = vadd.f32 0.0, %v519
    %v521 = vpop.f32.mrb[0].mxu0
    %v522 = vadd.f32 0.0, %v521
    %v523 = vpop.f32.mrb[0].mxu0
    %v524 = vpop.f32.mrb[0].mxu0
    %525 = vdwg.mxu0
    %v526 = vadd.f32 %v164, %v520
    %v527 = vadd.f32 %v166, %v522
    %v528 = vtanh.pop %v526
    %v529 = vtanh.pop %v527
    %v530 = vmul.f32 %v528, 0.5
    %v531 = vadd.f32 %v530, 0.5
    %v532 = vmul.f32 %v529, 0.5
    %v533 = vadd.f32 %v532, 0.5
    %v534 = vmul.f32 %v531, %v322
    %v535 = vmul.f32 %v531, %v529
    %537 = vrot.lane.b32.xlu0 %v535, 64
    %v538 = vpop.permute.xlu0 %537
    %v540 = vadd.f32 %v534, %v538
    %v541 = vtanh.pop %v540
    %v542 = vmul.f32 %v533, %v541
    %544 = vrot.lane.b32.xlu0 %v542, 64
    %v545 = vpop.permute.xlu0 %544
    %v547 = vsel %vm263, %v545, %v477
    %v548 = vpack.c.bf16 %v547, %v547
    %549 = vmatprep.subr.bf16.mxu0 %v391
    %550 = vmatpush1.bf16.msra.mxu0 %v390
    %551 = vmatprep.subr.bf16.mxu0 %v393
    %552 = vmatpush1.bf16.msra.mxu0 %v392
    %553 = vmatprep.subr.bf16.mxu0 %v395
    %554 = vmatpush1.bf16.msra.mxu0 %v394
    %555 = vmatprep.subr.bf16.mxu0 %v397
    %556 = vmatpush1.bf16.msra.mxu0 %v396
    %557 = vmatprep.subr.bf16.mxu0 %v399
    %558 = vmatpush1.bf16.msra.mxu0 %v398
    %559 = vmatprep.subr.bf16.mxu0 %v401
    %560 = vmatpush1.bf16.msra.mxu0 %v400
    %561 = vmatprep.subr.bf16.mxu0 %v403
    %562 = vmatpush1.bf16.msra.mxu0 %v402
    %563 = vmatprep.subr.bf16.mxu0 %v405
    %564 = vmatpush1.bf16.msra.mxu0 %v404
    %565 = vmatprep.subr.bf16.mxu0 0
    %566 = vmatpush1.bf16.msra.mxu0 0
    %567 = vmatprep.subr.bf16.mxu0 0
    %568 = vmatpush1.bf16.msra.mxu0 0
    %569 = vmatprep.subr.bf16.mxu0 0
    %570 = vmatpush1.bf16.msra.mxu0 0
    %571 = vmatprep.subr.bf16.mxu0 0
    %572 = vmatpush1.bf16.msra.mxu0 0
    %573 = vmatprep.subr.bf16.mxu0 0
    %574 = vmatpush1.bf16.msra.mxu0 0
    %575 = vmatprep.subr.bf16.mxu0 0
    %576 = vmatpush1.bf16.msra.mxu0 0
    %577 = vmatprep.subr.bf16.mxu0 0
    %578 = vmatpush1.bf16.msra.mxu0 0
    %579 = vmatprep.subr.bf16.mxu0 0
    %580 = vmatpush1.bf16.msra.mxu0 0
    %581 = vmatprep.mubr.bf16.mxu0 0
    %582 = vmatmul.mubr.bf16.gmra.mrb[0].mxu0 %v548
    %v583 = vpop.f32.mrb[0].mxu0
    %v584 = vadd.f32 %v335, %v583
    %v585 = vpop.f32.mrb[0].mxu0
    %v586 = vadd.f32 %v339, %v585
    %v587 = vpop.f32.mrb[0].mxu0
    %v588 = vpop.f32.mrb[0].mxu0
    %589 = vdwg.mxu0
    %v590 = vtanh.pop %v584
    %v591 = vtanh.pop %v586
    %v592 = vmul.f32 %v590, 0.5
    %v593 = vadd.f32 %v592, 0.5
    %v594 = vmul.f32 %v591, 0.5
    %v595 = vadd.f32 %v594, 0.5
    %v596 = vmul.f32 %v593, %v475
    %v597 = vmul.f32 %v593, %v591
    %599 = vrot.lane.b32.xlu0 %v597, 64
    %v600 = vpop.permute.xlu0 %599
    %v602 = vadd.f32 %v596, %v600
    %v603 = vtanh.pop %v602
    %v604 = vmul.f32 %v595, %v603
    %v605 = vpack.c.bf16 %v542, %v542
    %607 = vrot.lane.b32.xlu0 %v605, 64
    %v608 = vpop.permute.xlu0 %607
    %v610 = vsel %vm263, %v608, 0
    %612 = vmatprep.subr.bf16.mxu0 %v248
    %613 = vmatpush1.bf16.msra.mxu0 %v247
    %614 = vmatprep.subr.bf16.mxu0 %v250
    %615 = vmatpush1.bf16.msra.mxu0 %v249
    %616 = vmatprep.subr.bf16.mxu0 %v252
    %617 = vmatpush1.bf16.msra.mxu0 %v251
    %618 = vmatprep.subr.bf16.mxu0 %v254
    %619 = vmatpush1.bf16.msra.mxu0 %v253
    %620 = vmatprep.subr.bf16.mxu0 0
    %621 = vmatpush1.bf16.msra.mxu0 0
    %622 = vmatprep.subr.bf16.mxu0 0
    %623 = vmatpush1.bf16.msra.mxu0 0
    %624 = vmatprep.subr.bf16.mxu0 0
    %625 = vmatpush1.bf16.msra.mxu0 0
    %626 = vmatprep.subr.bf16.mxu0 0
    %627 = vmatpush1.bf16.msra.mxu0 0
    %628 = vmatprep.subr.bf16.mxu0 0
    %629 = vmatpush1.bf16.msra.mxu0 0
    %630 = vmatprep.subr.bf16.mxu0 0
    %631 = vmatpush1.bf16.msra.mxu0 0
    %632 = vmatprep.subr.bf16.mxu0 0
    %633 = vmatpush1.bf16.msra.mxu0 0
    %634 = vmatprep.subr.bf16.mxu0 0
    %635 = vmatpush1.bf16.msra.mxu0 0
    %636 = vmatprep.subr.bf16.mxu0 0
    %637 = vmatpush1.bf16.msra.mxu0 0
    %638 = vmatprep.subr.bf16.mxu0 0
    %639 = vmatpush1.bf16.msra.mxu0 0
    %640 = vmatprep.subr.bf16.mxu0 0
    %641 = vmatpush1.bf16.msra.mxu0 0
    %642 = vmatprep.subr.bf16.mxu0 0
    %643 = vmatpush1.bf16.msra.mxu0 0
    %644 = vmatprep.mubr.bf16.mxu0 0
    %645 = vmatmul.mubr.bf16.gmra.mrb[0].mxu0 %v610
    %v646 = vpop.f32.mrb[0].mxu0
    %v647 = vadd.f32 0.0, %v646
    %v648 = vpop.f32.mrb[0].mxu0
    %v649 = vadd.f32 0.0, %v648
    %v650 = vpop.f32.mrb[0].mxu0
    %v651 = vpop.f32.mrb[0].mxu0
    %652 = vdwg.mxu0
    %v653 = vadd.f32 %v170, %v647
    %v654 = vadd.f32 %v172, %v649
    %v655 = vtanh.pop %v653
    %v656 = vtanh.pop %v654
    %v657 = vmul.f32 %v655, 0.5
    %v658 = vadd.f32 %v657, 0.5
    %v659 = vmul.f32 %v656, 0.5
    %v660 = vadd.f32 %v659, 0.5
    %v661 = vmul.f32 %v658, %v540
    %v662 = vmul.f32 %v658, %v656
    %664 = vrot.lane.b32.xlu0 %v662, 64
    %v665 = vpop.permute.xlu0 %664
    %v667 = vadd.f32 %v661, %v665
    %v668 = vtanh.pop %v667
    %v669 = vmul.f32 %v660, %v668
    %671 = vrot.lane.b32.xlu0 %v669, 64
    %v672 = vpop.permute.xlu0 %671
    %v674 = vsel %vm263, %v672, %v604
    %v675 = vpack.c.bf16 %v674, %v674
    %676 = vmatprep.subr.bf16.mxu0 %v391
    %677 = vmatpush1.bf16.msra.mxu0 %v390
    %678 = vmatprep.subr.bf16.mxu0 %v393
    %679 = vmatpush1.bf16.msra.mxu0 %v392
    %680 = vmatprep.subr.bf16.mxu0 %v395
    %681 = vmatpush1.bf16.msra.mxu0 %v394
    %682 = vmatprep.subr.bf16.mxu0 %v397
    %683 = vmatpush1.bf16.msra.mxu0 %v396
    %684 = vmatprep.subr.bf16.mxu0 %v399
    %685 = vmatpush1.bf16.msra.mxu0 %v398
    %686 = vmatprep.subr.bf16.mxu0 %v401
    %687 = vmatpush1.bf16.msra.mxu0 %v400
    %688 = vmatprep.subr.bf16.mxu0 %v403
    %689 = vmatpush1.bf16.msra.mxu0 %v402
    %690 = vmatprep.subr.bf16.mxu0 %v405
    %691 = vmatpush1.bf16.msra.mxu0 %v404
    %692 = vmatprep.subr.bf16.mxu0 0
    %693 = vmatpush1.bf16.msra.mxu0 0
    %694 = vmatprep.subr.bf16.mxu0 0
    %695 = vmatpush1.bf16.msra.mxu0 0
    %696 = vmatprep.subr.bf16.mxu0 0
    %697 = vmatpush1.bf16.msra.mxu0 0
    %698 = vmatprep.subr.bf16.mxu0 0
    %699 = vmatpush1.bf16.msra.mxu0 0
    %700 = vmatprep.subr.bf16.mxu0 0
    %701 = vmatpush1.bf16.msra.mxu0 0
    %702 = vmatprep.subr.bf16.mxu0 0
    %703 = vmatpush1.bf16.msra.mxu0 0
    %704 = vmatprep.subr.bf16.mxu0 0
    %705 = vmatpush1.bf16.msra.mxu0 0
    %706 = vmatprep.subr.bf16.mxu0 0
    %707 = vmatpush1.bf16.msra.mxu0 0
    %708 = vmatprep.mubr.bf16.mxu0 0
    %709 = vmatmul.mubr.bf16.gmra.mrb[0].mxu0 %v675
    %v710 = vpop.f32.mrb[0].mxu0
    %v711 = vadd.f32 %v335, %v710
    %v712 = vpop.f32.mrb[0].mxu0
    %v713 = vadd.f32 %v339, %v712
    %v714 = vpop.f32.mrb[0].mxu0
    %v715 = vpop.f32.mrb[0].mxu0
    %716 = vdwg.mxu0
    %v717 = vtanh.pop %v711
    %v718 = vtanh.pop %v713
    %v719 = vmul.f32 %v717, 0.5
    %v720 = vadd.f32 %v719, 0.5
    %v721 = vmul.f32 %v718, 0.5
    %v722 = vadd.f32 %v721, 0.5
    %v723 = vmul.f32 %v720, %v602
    %v724 = vmul.f32 %v720, %v718
    %726 = vrot.lane.b32.xlu0 %v724, 64
    %v727 = vpop.permute.xlu0 %726
    %v729 = vadd.f32 %v723, %v727
    %v730 = vtanh.pop %v729
    %v731 = vmul.f32 %v722, %v730
    %v732 = vpack.c.bf16 %v669, %v669
    %734 = vrot.lane.b32.xlu0 %v732, 64
    %v735 = vpop.permute.xlu0 %734
    %v737 = vsel %vm263, %v735, 0
    %739 = vmatprep.subr.bf16.mxu0 %v248
    %740 = vmatpush1.bf16.msra.mxu0 %v247
    %741 = vmatprep.subr.bf16.mxu0 %v250
    %742 = vmatpush1.bf16.msra.mxu0 %v249
    %743 = vmatprep.subr.bf16.mxu0 %v252
    %744 = vmatpush1.bf16.msra.mxu0 %v251
    %745 = vmatprep.subr.bf16.mxu0 %v254
    %746 = vmatpush1.bf16.msra.mxu0 %v253
    %747 = vmatprep.subr.bf16.mxu0 0
    %748 = vmatpush1.bf16.msra.mxu0 0
    %749 = vmatprep.subr.bf16.mxu0 0
    %750 = vmatpush1.bf16.msra.mxu0 0
    %751 = vmatprep.subr.bf16.mxu0 0
    %752 = vmatpush1.bf16.msra.mxu0 0
    %753 = vmatprep.subr.bf16.mxu0 0
    %754 = vmatpush1.bf16.msra.mxu0 0
    %755 = vmatprep.subr.bf16.mxu0 0
    %756 = vmatpush1.bf16.msra.mxu0 0
    %757 = vmatprep.subr.bf16.mxu0 0
    %758 = vmatpush1.bf16.msra.mxu0 0
    %759 = vmatprep.subr.bf16.mxu0 0
    %760 = vmatpush1.bf16.msra.mxu0 0
    %761 = vmatprep.subr.bf16.mxu0 0
    %762 = vmatpush1.bf16.msra.mxu0 0
    %763 = vmatprep.subr.bf16.mxu0 0
    %764 = vmatpush1.bf16.msra.mxu0 0
    %765 = vmatprep.subr.bf16.mxu0 0
    %766 = vmatpush1.bf16.msra.mxu0 0
    %767 = vmatprep.subr.bf16.mxu0 0
    %768 = vmatpush1.bf16.msra.mxu0 0
    %769 = vmatprep.subr.bf16.mxu0 0
    %770 = vmatpush1.bf16.msra.mxu0 0
    %771 = vmatprep.mubr.bf16.mxu0 0
    %772 = vmatmul.mubr.bf16.gmra.mrb[0].mxu0 %v737
    %v773 = vpop.f32.mrb[0].mxu0
    %v774 = vadd.f32 0.0, %v773
    %v775 = vpop.f32.mrb[0].mxu0
    %v776 = vadd.f32 0.0, %v775
    %v777 = vpop.f32.mrb[0].mxu0
    %v778 = vpop.f32.mrb[0].mxu0
    %779 = vdwg.mxu0
    %v780 = vadd.f32 %v174, %v774
    %v781 = vadd.f32 %v176, %v776
    %v782 = vtanh.pop %v780
    %v783 = vtanh.pop %v781
    %v784 = vmul.f32 %v782, 0.5
    %v785 = vadd.f32 %v784, 0.5
    %v786 = vmul.f32 %v783, 0.5
    %v787 = vadd.f32 %v786, 0.5
    %v788 = vmul.f32 %v785, %v667
    %v789 = vmul.f32 %v785, %v783
    %791 = vrot.lane.b32.xlu0 %v789, 64
    %v792 = vpop.permute.xlu0 %791
    %v794 = vadd.f32 %v788, %v792
    %v795 = vtanh.pop %v794
    %v796 = vmul.f32 %v787, %v795
    %798 = vrot.lane.b32.xlu0 %v796, 64
    %v799 = vpop.permute.xlu0 %798
    %v801 = vsel %vm263, %v799, %v731
    %v802 = vpack.c.bf16 %v801, %v801
    %803 = vmatprep.subr.bf16.mxu0 %v391
    %804 = vmatpush1.bf16.msra.mxu0 %v390
    %805 = vmatprep.subr.bf16.mxu0 %v393
    %806 = vmatpush1.bf16.msra.mxu0 %v392
    %807 = vmatprep.subr.bf16.mxu0 %v395
    %808 = vmatpush1.bf16.msra.mxu0 %v394
    %809 = vmatprep.subr.bf16.mxu0 %v397
    %810 = vmatpush1.bf16.msra.mxu0 %v396
    %811 = vmatprep.subr.bf16.mxu0 %v399
    %812 = vmatpush1.bf16.msra.mxu0 %v398
    %813 = vmatprep.subr.bf16.mxu0 %v401
    %814 = vmatpush1.bf16.msra.mxu0 %v400
    %815 = vmatprep.subr.bf16.mxu0 %v403
    %816 = vmatpush1.bf16.msra.mxu0 %v402
    %817 = vmatprep.subr.bf16.mxu0 %v405
    %818 = vmatpush1.bf16.msra.mxu0 %v404
    %819 = vmatprep.subr.bf16.mxu0 0
    %820 = vmatpush1.bf16.msra.mxu0 0
    %821 = vmatprep.subr.bf16.mxu0 0
    %822 = vmatpush1.bf16.msra.mxu0 0
    %823 = vmatprep.subr.bf16.mxu0 0
    %824 = vmatpush1.bf16.msra.mxu0 0
    %825 = vmatprep.subr.bf16.mxu0 0
    %826 = vmatpush1.bf16.msra.mxu0 0
    %827 = vmatprep.subr.bf16.mxu0 0
    %828 = vmatpush1.bf16.msra.mxu0 0
    %829 = vmatprep.subr.bf16.mxu0 0
    %830 = vmatpush1.bf16.msra.mxu0 0
    %831 = vmatprep.subr.bf16.mxu0 0
    %832 = vmatpush1.bf16.msra.mxu0 0
    %833 = vmatprep.subr.bf16.mxu0 0
    %834 = vmatpush1.bf16.msra.mxu0 0
    %835 = vmatprep.mubr.bf16.mxu0 0
    %836 = vmatmul.mubr.bf16.gmra.mrb[0].mxu0 %v802
    %v837 = vpop.f32.mrb[0].mxu0
    %v838 = vadd.f32 %v335, %v837
    %v839 = vpop.f32.mrb[0].mxu0
    %v840 = vadd.f32 %v339, %v839
    %v841 = vpop.f32.mrb[0].mxu0
    %v842 = vpop.f32.mrb[0].mxu0
    %843 = vdwg.mxu0
    %v844 = vtanh.pop %v838
    %v845 = vtanh.pop %v840
    %v846 = vmul.f32 %v844, 0.5
    %v847 = vadd.f32 %v846, 0.5
    %v848 = vmul.f32 %v845, 0.5
    %v849 = vadd.f32 %v848, 0.5
    %v850 = vmul.f32 %v847, %v729
    %v851 = vmul.f32 %v847, %v845
    %853 = vrot.lane.b32.xlu0 %v851, 64
    %v854 = vpop.permute.xlu0 %853
    %v856 = vadd.f32 %v850, %v854
    %v857 = vtanh.pop %v856
    %v858 = vmul.f32 %v849, %v857
    %v859 = vpack.c.bf16 %v796, %v796
    %861 = vrot.lane.b32.xlu0 %v859, 64
    %v862 = vpop.permute.xlu0 %861
    %v864 = vsel %vm263, %v862, 0
    %866 = vmatprep.subr.bf16.mxu0 %v248
    %867 = vmatpush1.bf16.msra.mxu0 %v247
    %868 = vmatprep.subr.bf16.mxu0 %v250
    %869 = vmatpush1.bf16.msra.mxu0 %v249
    %870 = vmatprep.subr.bf16.mxu0 %v252
    %871 = vmatpush1.bf16.msra.mxu0 %v251
    %872 = vmatprep.subr.bf16.mxu0 %v254
    %873 = vmatpush1.bf16.msra.mxu0 %v253
    %874 = vmatprep.subr.bf16.mxu0 0
    %875 = vmatpush1.bf16.msra.mxu0 0
    %876 = vmatprep.subr.bf16.mxu0 0
    %877 = vmatpush1.bf16.msra.mxu0 0
    %878 = vmatprep.subr.bf16.mxu0 0
    %879 = vmatpush1.bf16.msra.mxu0 0
    %880 = vmatprep.subr.bf16.mxu0 0
    %881 = vmatpush1.bf16.msra.mxu0 0
    %882 = vmatprep.subr.bf16.mxu0 0
    %883 = vmatpush1.bf16.msra.mxu0 0
    %884 = vmatprep.subr.bf16.mxu0 0
    %885 = vmatpush1.bf16.msra.mxu0 0
    %886 = vmatprep.subr.bf16.mxu0 0
    %887 = vmatpush1.bf16.msra.mxu0 0
    %888 = vmatprep.subr.bf16.mxu0 0
    %889 = vmatpush1.bf16.msra.mxu0 0
    %890 = vmatprep.subr.bf16.mxu0 0
    %891 = vmatpush1.bf16.msra.mxu0 0
    %892 = vmatprep.subr.bf16.mxu0 0
    %893 = vmatpush1.bf16.msra.mxu0 0
    %894 = vmatprep.subr.bf16.mxu0 0
    %895 = vmatpush1.bf16.msra.mxu0 0
    %896 = vmatprep.subr.bf16.mxu0 0
    %897 = vmatpush1.bf16.msra.mxu0 0
    %898 = vmatprep.mubr.bf16.mxu0 0
    %899 = vmatmul.mubr.bf16.gmra.mrb[0].mxu0 %v864
    %v900 = vpop.f32.mrb[0].mxu0
    %v901 = vadd.f32 0.0, %v900
    %v902 = vpop.f32.mrb[0].mxu0
    %v903 = vadd.f32 0.0, %v902
    %v904 = vpop.f32.mrb[0].mxu0
    %v905 = vpop.f32.mrb[0].mxu0
    %906 = vdwg.mxu0
    %v907 = vadd.f32 %v180, %v901
    %v908 = vadd.f32 %v182, %v903
    %v909 = vtanh.pop %v907
    %v910 = vtanh.pop %v908
    %v911 = vmul.f32 %v909, 0.5
    %v912 = vadd.f32 %v911, 0.5
    %v913 = vmul.f32 %v910, 0.5
    %v914 = vadd.f32 %v913, 0.5
    %v915 = vmul.f32 %v912, %v794
    %v916 = vmul.f32 %v912, %v910
    %918 = vrot.lane.b32.xlu0 %v916, 64
    %v919 = vpop.permute.xlu0 %918
    %v921 = vadd.f32 %v915, %v919
    %v922 = vtanh.pop %v921
    %v923 = vmul.f32 %v914, %v922
    %925 = vrot.lane.b32.xlu0 %v923, 64
    %v926 = vpop.permute.xlu0 %925
    %v928 = vsel %vm263, %v926, %v858
    %v929 = vpack.c.bf16 %v928, %v928
    %930 = vmatprep.subr.bf16.mxu0 %v391
    %931 = vmatpush1.bf16.msra.mxu0 %v390
    %932 = vmatprep.subr.bf16.mxu0 %v393
    %933 = vmatpush1.bf16.msra.mxu0 %v392
    %934 = vmatprep.subr.bf16.mxu0 %v395
    %935 = vmatpush1.bf16.msra.mxu0 %v394
    %936 = vmatprep.subr.bf16.mxu0 %v397
    %937 = vmatpush1.bf16.msra.mxu0 %v396
    %938 = vmatprep.subr.bf16.mxu0 %v399
    %939 = vmatpush1.bf16.msra.mxu0 %v398
    %940 = vmatprep.subr.bf16.mxu0 %v401
    %941 = vmatpush1.bf16.msra.mxu0 %v400
    %942 = vmatprep.subr.bf16.mxu0 %v403
    %943 = vmatpush1.bf16.msra.mxu0 %v402
    %944 = vmatprep.subr.bf16.mxu0 %v405
    %945 = vmatpush1.bf16.msra.mxu0 %v404
    %946 = vmatprep.subr.bf16.mxu0 0
    %947 = vmatpush1.bf16.msra.mxu0 0
    %948 = vmatprep.subr.bf16.mxu0 0
    %949 = vmatpush1.bf16.msra.mxu0 0
    %950 = vmatprep.subr.bf16.mxu0 0
    %951 = vmatpush1.bf16.msra.mxu0 0
    %952 = vmatprep.subr.bf16.mxu0 0
    %953 = vmatpush1.bf16.msra.mxu0 0
    %954 = vmatprep.subr.bf16.mxu0 0
    %955 = vmatpush1.bf16.msra.mxu0 0
    %956 = vmatprep.subr.bf16.mxu0 0
    %957 = vmatpush1.bf16.msra.mxu0 0
    %958 = vmatprep.subr.bf16.mxu0 0
    %959 = vmatpush1.bf16.msra.mxu0 0
    %960 = vmatprep.subr.bf16.mxu0 0
    %961 = vmatpush1.bf16.msra.mxu0 0
    %962 = vmatprep.mubr.bf16.mxu0 0
    %963 = vmatmul.mubr.bf16.gmra.mrb[0].mxu0 %v929
    %v964 = vpop.f32.mrb[0].mxu0
    %v965 = vadd.f32 %v335, %v964
    %v966 = vpop.f32.mrb[0].mxu0
    %v967 = vadd.f32 %v339, %v966
    %v968 = vpop.f32.mrb[0].mxu0
    %v969 = vpop.f32.mrb[0].mxu0
    %970 = vdwg.mxu0
    %v971 = vtanh.pop %v965
    %v972 = vtanh.pop %v967
    %v973 = vmul.f32 %v971, 0.5
    %v974 = vadd.f32 %v973, 0.5
    %v975 = vmul.f32 %v972, 0.5
    %v976 = vadd.f32 %v975, 0.5
    %v977 = vmul.f32 %v974, %v856
    %v978 = vmul.f32 %v974, %v972
    %980 = vrot.lane.b32.xlu0 %v978, 64
    %v981 = vpop.permute.xlu0 %980
    %v983 = vadd.f32 %v977, %v981
    %v984 = vtanh.pop %v983
    %v985 = vmul.f32 %v976, %v984
    %v986 = vpack.c.bf16 %v923, %v923
    %988 = vrot.lane.b32.xlu0 %v986, 64
    %v989 = vpop.permute.xlu0 %988
    %v991 = vsel %vm263, %v989, 0
    %993 = vmatprep.subr.bf16.mxu0 %v248
    %994 = vmatpush1.bf16.msra.mxu0 %v247
    %995 = vmatprep.subr.bf16.mxu0 %v250
    %996 = vmatpush1.bf16.msra.mxu0 %v249
    %997 = vmatprep.subr.bf16.mxu0 %v252
    %998 = vmatpush1.bf16.msra.mxu0 %v251
    %999 = vmatprep.subr.bf16.mxu0 %v254
    %1000 = vmatpush1.bf16.msra.mxu0 %v253
    %1001 = vmatprep.subr.bf16.mxu0 0
    %1002 = vmatpush1.bf16.msra.mxu0 0
    %1003 = vmatprep.subr.bf16.mxu0 0
    %1004 = vmatpush1.bf16.msra.mxu0 0
    %1005 = vmatprep.subr.bf16.mxu0 0
    %1006 = vmatpush1.bf16.msra.mxu0 0
    %1007 = vmatprep.subr.bf16.mxu0 0
    %1008 = vmatpush1.bf16.msra.mxu0 0
    %1009 = vmatprep.subr.bf16.mxu0 0
    %1010 = vmatpush1.bf16.msra.mxu0 0
    %1011 = vmatprep.subr.bf16.mxu0 0
    %1012 = vmatpush1.bf16.msra.mxu0 0
    %1013 = vmatprep.subr.bf16.mxu0 0
    %1014 = vmatpush1.bf16.msra.mxu0 0
    %1015 = vmatprep.subr.bf16.mxu0 0
    %1016 = vmatpush1.bf16.msra.mxu0 0
    %1017 = vmatprep.subr.bf16.mxu0 0
    %1018 = vmatpush1.bf16.msra.mxu0 0
    %1019 = vmatprep.subr.bf16.mxu0 0
    %1020 = vmatpush1.bf16.msra.mxu0 0
    %1021 = vmatprep.subr.bf16.mxu0 0
    %1022 = vmatpush1.bf16.msra.mxu0 0
    %1023 = vmatprep.subr.bf16.mxu0 0
    %1024 = vmatpush1.bf16.msra.mxu0 0
    %1025 = vmatprep.mubr.bf16.mxu0 0
    %1026 = vmatmul.mubr.bf16.gmra.mrb[0].mxu0 %v991
    %v1027 = vpop.f32.mrb[0].mxu0
    %v1028 = vadd.f32 0.0, %v1027
    %v1029 = vpop.f32.mrb[0].mxu0
    %v1030 = vadd.f32 0.0, %v1029
    %v1031 = vpop.f32.mrb[0].mxu0
    %v1032 = vpop.f32.mrb[0].mxu0
    %1033 = vdwg.mxu0
    %v1034 = vadd.f32 %v184, %v1028
    %v1035 = vadd.f32 %v186, %v1030
    %v1036 = vtanh.pop %v1034
    %v1037 = vtanh.pop %v1035
    %v1038 = vmul.f32 %v1036, 0.5
    %v1039 = vadd.f32 %v1038, 0.5
    %v1040 = vmul.f32 %v1037, 0.5
    %v1041 = vadd.f32 %v1040, 0.5
    %v1042 = vmul.f32 %v1039, %v921
    %v1043 = vmul.f32 %v1039, %v1037
    %1045 = vrot.lane.b32.xlu0 %v1043, 64
    %v1046 = vpop.permute.xlu0 %1045
    %v1048 = vadd.f32 %v1042, %v1046
    %v1049 = vtanh.pop %v1048
    %v1050 = vmul.f32 %v1041, %v1049
    %1052 = vrot.lane.b32.xlu0 %v1050, 64
    %v1053 = vpop.permute.xlu0 %1052
    %v1055 = vsel %vm263, %v1053, %v985
    %v1056 = vpack.c.bf16 %v1055, %v1055
    %1057 = vmatprep.subr.bf16.mxu0 %v391
    %1058 = vmatpush1.bf16.msra.mxu0 %v390
    %1059 = vmatprep.subr.bf16.mxu0 %v393
    %1060 = vmatpush1.bf16.msra.mxu0 %v392
    %1061 = vmatprep.subr.bf16.mxu0 %v395
    %1062 = vmatpush1.bf16.msra.mxu0 %v394
    %1063 = vmatprep.subr.bf16.mxu0 %v397
    %1064 = vmatpush1.bf16.msra.mxu0 %v396
    %1065 = vmatprep.subr.bf16.mxu0 %v399
    %1066 = vmatpush1.bf16.msra.mxu0 %v398
    %1067 = vmatprep.subr.bf16.mxu0 %v401
    %1068 = vmatpush1.bf16.msra.mxu0 %v400
    %1069 = vmatprep.subr.bf16.mxu0 %v403
    %1070 = vmatpush1.bf16.msra.mxu0 %v402
    %1071 = vmatprep.subr.bf16.mxu0 %v405
    %1072 = vmatpush1.bf16.msra.mxu0 %v404
    %1073 = vmatprep.subr.bf16.mxu0 0
    %1074 = vmatpush1.bf16.msra.mxu0 0
    %1075 = vmatprep.subr.bf16.mxu0 0
    %1076 = vmatpush1.bf16.msra.mxu0 0
    %1077 = vmatprep.subr.bf16.mxu0 0
    %1078 = vmatpush1.bf16.msra.mxu0 0
    %1079 = vmatprep.subr.bf16.mxu0 0
    %1080 = vmatpush1.bf16.msra.mxu0 0
    %1081 = vmatprep.subr.bf16.mxu0 0
    %1082 = vmatpush1.bf16.msra.mxu0 0
    %1083 = vmatprep.subr.bf16.mxu0 0
    %1084 = vmatpush1.bf16.msra.mxu0 0
    %1085 = vmatprep.subr.bf16.mxu0 0
    %1086 = vmatpush1.bf16.msra.mxu0 0
    %1087 = vmatprep.subr.bf16.mxu0 0
    %1088 = vmatpush1.bf16.msra.mxu0 0
    %1089 = vmatprep.mubr.bf16.mxu0 0
    %1090 = vmatmul.mubr.bf16.gmra.mrb[0].mxu0 %v1056
    %v1091 = vpop.f32.mrb[0].mxu0
    %v1092 = vadd.f32 %v335, %v1091
    %v1093 = vpop.f32.mrb[0].mxu0
    %v1094 = vadd.f32 %v339, %v1093
    %v1095 = vpop.f32.mrb[0].mxu0
    %v1096 = vpop.f32.mrb[0].mxu0
    %1097 = vdwg.mxu0
    %v1098 = vtanh.pop %v1092
    %v1099 = vtanh.pop %v1094
    %v1100 = vmul.f32 %v1098, 0.5
    %v1101 = vadd.f32 %v1100, 0.5
    %v1102 = vmul.f32 %v1099, 0.5
    %v1103 = vadd.f32 %v1102, 0.5
    %v1104 = vmul.f32 %v1101, %v983
    %v1105 = vmul.f32 %v1101, %v1099
    %1107 = vrot.lane.b32.xlu0 %v1105, 64
    %v1108 = vpop.permute.xlu0 %1107
    %v1110 = vadd.f32 %v1104, %v1108
    %v1111 = vtanh.pop %v1110
    %v1112 = vmul.f32 %v1103, %v1111
    %v1113 = vpack.c.bf16 %v1050, %v1050
    %1115 = vrot.lane.b32.xlu0 %v1113, 64
    %v1116 = vpop.permute.xlu0 %1115
    %v1118 = vsel %vm263, %v1116, 0
    %1120 = vmatprep.subr.bf16.mxu0 %v248
    %1121 = vmatpush1.bf16.msra.mxu0 %v247
    %1122 = vmatprep.subr.bf16.mxu0 %v250
    %1123 = vmatpush1.bf16.msra.mxu0 %v249
    %1124 = vmatprep.subr.bf16.mxu0 %v252
    %1125 = vmatpush1.bf16.msra.mxu0 %v251
    %1126 = vmatprep.subr.bf16.mxu0 %v254
    %1127 = vmatpush1.bf16.msra.mxu0 %v253
    %1128 = vmatprep.subr.bf16.mxu0 0
    %1129 = vmatpush1.bf16.msra.mxu0 0
    %1130 = vmatprep.subr.bf16.mxu0 0
    %1131 = vmatpush1.bf16.msra.mxu0 0
    %1132 = vmatprep.subr.bf16.mxu0 0
    %1133 = vmatpush1.bf16.msra.mxu0 0
    %1134 = vmatprep.subr.bf16.mxu0 0
    %1135 = vmatpush1.bf16.msra.mxu0 0
    %1136 = vmatprep.subr.bf16.mxu0 0
    %1137 = vmatpush1.bf16.msra.mxu0 0
    %1138 = vmatprep.subr.bf16.mxu0 0
    %1139 = vmatpush1.bf16.msra.mxu0 0
    %1140 = vmatprep.subr.bf16.mxu0 0
    %1141 = vmatpush1.bf16.msra.mxu0 0
    %1142 = vmatprep.subr.bf16.mxu0 0
    %1143 = vmatpush1.bf16.msra.mxu0 0
    %1144 = vmatprep.subr.bf16.mxu0 0
    %1145 = vmatpush1.bf16.msra.mxu0 0
    %1146 = vmatprep.subr.bf16.mxu0 0
    %1147 = vmatpush1.bf16.msra.mxu0 0
    %1148 = vmatprep.subr.bf16.mxu0 0
    %1149 = vmatpush1.bf16.msra.mxu0 0
    %1150 = vmatprep.subr.bf16.mxu0 0
    %1151 = vmatpush1.bf16.msra.mxu0 0
    %1152 = vmatprep.mubr.bf16.mxu0 0
    %1153 = vmatmul.mubr.bf16.gmra.mrb[0].mxu0 %v1118
    %v1154 = vpop.f32.mrb[0].mxu0
    %v1155 = vadd.f32 0.0, %v1154
    %v1156 = vpop.f32.mrb[0].mxu0
    %v1157 = vadd.f32 0.0, %v1156
    %v1158 = vpop.f32.mrb[0].mxu0
    %v1159 = vpop.f32.mrb[0].mxu0
    %1160 = vdwg.mxu0
    %v1161 = vadd.f32 %v190, %v1155
    %v1162 = vadd.f32 %v192, %v1157
    %v1163 = vtanh.pop %v1161
    %v1164 = vtanh.pop %v1162
    %v1165 = vmul.f32 %v1163, 0.5
    %v1166 = vadd.f32 %v1165, 0.5
    %v1167 = vmul.f32 %v1164, 0.5
    %v1168 = vadd.f32 %v1167, 0.5
    %v1169 = vmul.f32 %v1166, %v1048
    %v1170 = vmul.f32 %v1166, %v1164
    %1172 = vrot.lane.b32.xlu0 %v1170, 64
    %v1173 = vpop.permute.xlu0 %1172
    %v1175 = vadd.f32 %v1169, %v1173
    %v1176 = vtanh.pop %v1175
    %v1177 = vmul.f32 %v1168, %v1176
    %1179 = vrot.lane.b32.xlu0 %v1177, 64
    %v1180 = vpop.permute.xlu0 %1179
    %v1182 = vsel %vm263, %v1180, %v1112
    %v1183 = vpack.c.bf16 %v1182, %v1182
    %1184 = vmatprep.subr.bf16.mxu0 %v391
    %1185 = vmatpush1.bf16.msra.mxu0 %v390
    %1186 = vmatprep.subr.bf16.mxu0 %v393
    %1187 = vmatpush1.bf16.msra.mxu0 %v392
    %1188 = vmatprep.subr.bf16.mxu0 %v395
    %1189 = vmatpush1.bf16.msra.mxu0 %v394
    %1190 = vmatprep.subr.bf16.mxu0 %v397
    %1191 = vmatpush1.bf16.msra.mxu0 %v396
    %1192 = vmatprep.subr.bf16.mxu0 %v399
    %1193 = vmatpush1.bf16.msra.mxu0 %v398
    %1194 = vmatprep.subr.bf16.mxu0 %v401
    %1195 = vmatpush1.bf16.msra.mxu0 %v400
    %1196 = vmatprep.subr.bf16.mxu0 %v403
    %1197 = vmatpush1.bf16.msra.mxu0 %v402
    %1198 = vmatprep.subr.bf16.mxu0 %v405
    %1199 = vmatpush1.bf16.msra.mxu0 %v404
    %1200 = vmatprep.subr.bf16.mxu0 0
    %1201 = vmatpush1.bf16.msra.mxu0 0
    %1202 = vmatprep.subr.bf16.mxu0 0
    %1203 = vmatpush1.bf16.msra.mxu0 0
    %1204 = vmatprep.subr.bf16.mxu0 0
    %1205 = vmatpush1.bf16.msra.mxu0 0
    %1206 = vmatprep.subr.bf16.mxu0 0
    %1207 = vmatpush1.bf16.msra.mxu0 0
    %1208 = vmatprep.subr.bf16.mxu0 0
    %1209 = vmatpush1.bf16.msra.mxu0 0
    %1210 = vmatprep.subr.bf16.mxu0 0
    %1211 = vmatpush1.bf16.msra.mxu0 0
    %1212 = vmatprep.subr.bf16.mxu0 0
    %1213 = vmatpush1.bf16.msra.mxu0 0
    %1214 = vmatprep.subr.bf16.mxu0 0
    %1215 = vmatpush1.bf16.msra.mxu0 0
    %1216 = vmatprep.mubr.bf16.mxu0 0
    %1217 = vmatmul.mubr.bf16.gmra.mrb[0].mxu0 %v1183
    %v1218 = vpop.f32.mrb[0].mxu0
    %v1219 = vadd.f32 %v335, %v1218
    %v1220 = vpop.f32.mrb[0].mxu0
    %v1221 = vadd.f32 %v339, %v1220
    %v1222 = vpop.f32.mrb[0].mxu0
    %v1223 = vpop.f32.mrb[0].mxu0
    %1224 = vdwg.mxu0
    %v1225 = vtanh.pop %v1219
    %v1226 = vtanh.pop %v1221
    %v1227 = vmul.f32 %v1225, 0.5
    %v1228 = vadd.f32 %v1227, 0.5
    %v1229 = vmul.f32 %v1226, 0.5
    %v1230 = vadd.f32 %v1229, 0.5
    %v1231 = vmul.f32 %v1228, %v1110
    %v1232 = vmul.f32 %v1228, %v1226
    %1234 = vrot.lane.b32.xlu0 %v1232, 64
    %v1235 = vpop.permute.xlu0 %1234
    %v1237 = vadd.f32 %v1231, %v1235
    %v1238 = vtanh.pop %v1237
    %v1239 = vmul.f32 %v1230, %v1238
    %v1240 = vpack.c.bf16 %v1177, %v1177
    %1242 = vrot.lane.b32.xlu0 %v1240, 64
    %v1243 = vpop.permute.xlu0 %1242
    %v1245 = vsel %vm263, %v1243, 0
    %1247 = vmatprep.subr.bf16.mxu0 %v248
    %1248 = vmatpush1.bf16.msra.mxu0 %v247
    %1249 = vmatprep.subr.bf16.mxu0 %v250
    %1250 = vmatpush1.bf16.msra.mxu0 %v249
    %1251 = vmatprep.subr.bf16.mxu0 %v252
    %1252 = vmatpush1.bf16.msra.mxu0 %v251
    %1253 = vmatprep.subr.bf16.mxu0 %v254
    %1254 = vmatpush1.bf16.msra.mxu0 %v253
    %1255 = vmatprep.subr.bf16.mxu0 0
    %1256 = vmatpush1.bf16.msra.mxu0 0
    %1257 = vmatprep.subr.bf16.mxu0 0
    %1258 = vmatpush1.bf16.msra.mxu0 0
    %1259 = vmatprep.subr.bf16.mxu0 0
    %1260 = vmatpush1.bf16.msra.mxu0 0
    %1261 = vmatprep.subr.bf16.mxu0 0
    %1262 = vmatpush1.bf16.msra.mxu0 0
    %1263 = vmatprep.subr.bf16.mxu0 0
    %1264 = vmatpush1.bf16.msra.mxu0 0
    %1265 = vmatprep.subr.bf16.mxu0 0
    %1266 = vmatpush1.bf16.msra.mxu0 0
    %1267 = vmatprep.subr.bf16.mxu0 0
    %1268 = vmatpush1.bf16.msra.mxu0 0
    %1269 = vmatprep.subr.bf16.mxu0 0
    %1270 = vmatpush1.bf16.msra.mxu0 0
    %1271 = vmatprep.subr.bf16.mxu0 0
    %1272 = vmatpush1.bf16.msra.mxu0 0
    %1273 = vmatprep.subr.bf16.mxu0 0
    %1274 = vmatpush1.bf16.msra.mxu0 0
    %1275 = vmatprep.subr.bf16.mxu0 0
    %1276 = vmatpush1.bf16.msra.mxu0 0
    %1277 = vmatprep.subr.bf16.mxu0 0
    %1278 = vmatpush1.bf16.msra.mxu0 0
    %1279 = vmatprep.mubr.bf16.mxu0 0
    %1280 = vmatmul.mubr.bf16.gmra.mrb[0].mxu0 %v1245
    %v1281 = vpop.f32.mrb[0].mxu0
    %v1282 = vadd.f32 0.0, %v1281
    %v1283 = vpop.f32.mrb[0].mxu0
    %v1284 = vadd.f32 0.0, %v1283
    %v1285 = vpop.f32.mrb[0].mxu0
    %v1286 = vpop.f32.mrb[0].mxu0
    %1287 = vdwg.mxu0
    %v1288 = vadd.f32 %v194, %v1282
    %v1289 = vadd.f32 %v196, %v1284
    %v1290 = vtanh.pop %v1288
    %v1291 = vtanh.pop %v1289
    %v1292 = vmul.f32 %v1290, 0.5
    %v1293 = vadd.f32 %v1292, 0.5
    %v1294 = vmul.f32 %v1291, 0.5
    %v1295 = vadd.f32 %v1294, 0.5
    %v1296 = vmul.f32 %v1293, %v1175
    %v1297 = vmul.f32 %v1293, %v1291
    %1299 = vrot.lane.b32.xlu0 %v1297, 64
    %v1300 = vpop.permute.xlu0 %1299
    %v1302 = vadd.f32 %v1296, %v1300
    %v1303 = vtanh.pop %v1302
    %v1304 = vmul.f32 %v1295, %v1303
    %1306 = vrot.lane.b32.xlu0 %v1304, 64
    %v1307 = vpop.permute.xlu0 %1306
    %v1309 = vsel %vm263, %v1307, %v1239
    %v1310 = vpack.c.bf16 %v1309, %v1309
    %1311 = vmatprep.subr.bf16.mxu0 %v391
    %1312 = vmatpush1.bf16.msra.mxu0 %v390
    %1313 = vmatprep.subr.bf16.mxu0 %v393
    %1314 = vmatpush1.bf16.msra.mxu0 %v392
    %1315 = vmatprep.subr.bf16.mxu0 %v395
    %1316 = vmatpush1.bf16.msra.mxu0 %v394
    %1317 = vmatprep.subr.bf16.mxu0 %v397
    %1318 = vmatpush1.bf16.msra.mxu0 %v396
    %1319 = vmatprep.subr.bf16.mxu0 %v399
    %1320 = vmatpush1.bf16.msra.mxu0 %v398
    %1321 = vmatprep.subr.bf16.mxu0 %v401
    %1322 = vmatpush1.bf16.msra.mxu0 %v400
    %1323 = vmatprep.subr.bf16.mxu0 %v403
    %1324 = vmatpush1.bf16.msra.mxu0 %v402
    %1325 = vmatprep.subr.bf16.mxu0 %v405
    %1326 = vmatpush1.bf16.msra.mxu0 %v404
    %1327 = vmatprep.subr.bf16.mxu0 0
    %1328 = vmatpush1.bf16.msra.mxu0 0
    %1329 = vmatprep.subr.bf16.mxu0 0
    %1330 = vmatpush1.bf16.msra.mxu0 0
    %1331 = vmatprep.subr.bf16.mxu0 0
    %1332 = vmatpush1.bf16.msra.mxu0 0
    %1333 = vmatprep.subr.bf16.mxu0 0
    %1334 = vmatpush1.bf16.msra.mxu0 0
    %1335 = vmatprep.subr.bf16.mxu0 0
    %1336 = vmatpush1.bf16.msra.mxu0 0
    %1337 = vmatprep.subr.bf16.mxu0 0
    %1338 = vmatpush1.bf16.msra.mxu0 0
    %1339 = vmatprep.subr.bf16.mxu0 0
    %1340 = vmatpush1.bf16.msra.mxu0 0
    %1341 = vmatprep.subr.bf16.mxu0 0
    %1342 = vmatpush1.bf16.msra.mxu0 0
    %1343 = vmatprep.mubr.bf16.mxu0 0
    %1344 = vmatmul.mubr.bf16.gmra.mrb[0].mxu0 %v1310
    %v1345 = vpop.f32.mrb[0].mxu0
    %v1346 = vadd.f32 %v335, %v1345
    %v1347 = vpop.f32.mrb[0].mxu0
    %v1348 = vadd.f32 %v339, %v1347
    %v1349 = vpop.f32.mrb[0].mxu0
    %v1350 = vpop.f32.mrb[0].mxu0
    %1351 = vdwg.mxu0
    %v1352 = vtanh.pop %v1346
    %v1353 = vtanh.pop %v1348
    %v1354 = vmul.f32 %v1352, 0.5
    %v1355 = vadd.f32 %v1354, 0.5
    %v1356 = vmul.f32 %v1353, 0.5
    %v1357 = vadd.f32 %v1356, 0.5
    %v1358 = vmul.f32 %v1355, %v1237
    %v1359 = vmul.f32 %v1355, %v1353
    %1361 = vrot.lane.b32.xlu0 %v1359, 64
    %v1362 = vpop.permute.xlu0 %1361
    %v1364 = vadd.f32 %v1358, %v1362
    %v1365 = vtanh.pop %v1364
    %v1366 = vmul.f32 %v1357, %v1365
    %v1367 = vpack.c.bf16 %v1366, %v1366
    %v1368 = vld [vmem:[%s6] sm:$0xf]
    %v1369 = vld [vmem:[%s6 + $0x4] sm:$0xf]
    %v1370 = vld [vmem:[%s6 + $0x8] sm:$0xf]
    %v1371 = vld [vmem:[%s6 + $0xc] sm:$0xf]
    %v1372 = vld [vmem:[%s6 + $0x10] sm:$0xf]
    %v1373 = vld [vmem:[%s6 + $0x14] sm:$0xf]
    %v1374 = vld [vmem:[%s6 + $0x18] sm:$0xf]
    %v1375 = vld [vmem:[%s6 + $0x1c] sm:$0xf]
    %v1376 = vld [vmem:[%s7] sm:$0x1]
    %v1378 = vlaneseq
    %v1379 = vshrl.u32 %v1378, 7
    %v1380 = vsub.s32 0, %v1379
    %v1381 = vrot.slane %v1376, %v1380
    %1384 = vrot.lane.b32.xlu0 %v1367, 64
    %v1385 = vpop.permute.xlu0 %1384
    %v1394 = vunpack.c.l.b16 %v1368
    %v1395 = vunpack.c.l.b16 %v1369
    %v1396 = vunpack.c.l.b16 %v1370
    %v1397 = vunpack.c.l.b16 %v1371
    %v1398 = vunpack.c.l.b16 %v1372
    %v1399 = vunpack.c.l.b16 %v1373
    %v1400 = vunpack.c.l.b16 %v1374
    %v1401 = vunpack.c.l.b16 %v1375
    %v1402 = vpack.c.b16 %v1395, %v1394
    %v1403 = vpack.c.b16 %v1397, %v1396
    %v1404 = vpack.c.b16 %v1399, %v1398
    %v1405 = vpack.c.b16 %v1401, %v1400
    %v1411 = vsel %vm263, %v1385, 0
    %1413 = vmatprep.subr.bf16.mxu0 0
    %1414 = vmatpush1.bf16.msra.mxu0 %v1402
    %1415 = vmatprep.subr.bf16.mxu0 0
    %1416 = vmatpush1.bf16.msra.mxu0 %v1403
    %1417 = vmatprep.subr.bf16.mxu0 0
    %1418 = vmatpush1.bf16.msra.mxu0 %v1404
    %1419 = vmatprep.subr.bf16.mxu0 0
    %1420 = vmatpush1.bf16.msra.mxu0 %v1405
    %1421 = vmatprep.subr.bf16.mxu0 0
    %1422 = vmatpush1.bf16.msra.mxu0 0
    %1423 = vmatprep.subr.bf16.mxu0 0
    %1424 = vmatpush1.bf16.msra.mxu0 0
    %1425 = vmatprep.subr.bf16.mxu0 0
    %1426 = vmatpush1.bf16.msra.mxu0 0
    %1427 = vmatprep.subr.bf16.mxu0 0
    %1428 = vmatpush1.bf16.msra.mxu0 0
    %1429 = vmatprep.subr.bf16.mxu0 0
    %1430 = vmatpush1.bf16.msra.mxu0 0
    %1431 = vmatprep.subr.bf16.mxu0 0
    %1432 = vmatpush1.bf16.msra.mxu0 0
    %1433 = vmatprep.subr.bf16.mxu0 0
    %1434 = vmatpush1.bf16.msra.mxu0 0
    %1435 = vmatprep.subr.bf16.mxu0 0
    %1436 = vmatpush1.bf16.msra.mxu0 0
    %1437 = vmatprep.subr.bf16.mxu0 0
    %1438 = vmatpush1.bf16.msra.mxu0 0
    %1439 = vmatprep.subr.bf16.mxu0 0
    %1440 = vmatpush1.bf16.msra.mxu0 0
    %1441 = vmatprep.subr.bf16.mxu0 0
    %1442 = vmatpush1.bf16.msra.mxu0 0
    %1443 = vmatprep.subr.bf16.mxu0 0
    %1444 = vmatpush1.bf16.msra.mxu0 0
    %1445 = vmatprep.mubr.bf16.mxu0 0
    %1446 = vmatmul.mubr.bf16.gmra.mrb[0].mxu0 %v1411
    %v1447 = vpop.f32.mrb[0].mxu0
    %v1448 = vadd.f32 %v1381, %v1447
    %v1449 = vpop.f32.mrb[0].mxu0
    %v1450 = vpop.f32.mrb[0].mxu0
    %v1451 = vpop.f32.mrb[0].mxu0
    %1452 = vdwg.mxu0
    %1453 = vst [vmem:[#allocation7] sm:$0xff] %v1448
    // Predicated region
    $region42: #{tpu_custom_call.1} parent=1 // pred_check
      _
    $region43: #{tpu_custom_call.1} parent=1 // pred_check_branch
      %1455 = sbr.rel (0) target = $region45
    $region44: #{tpu_custom_call.1} parent=1 // pred_region
      %s1457 = ssub.s32 128, 128
      %1458 = vsyncadd [#allocation4], %s1457
      %s1460 = sshll.u32 [#allocation7], 4
      %s1461 = int_to_ptr.vmem [resolvable:$true] %s1460
      %1463 = dma.vmem_to_hbm [thread:$0]  %s1461, 128, %s8, [#allocation4]
    $region45: #{tpu_custom_call.1} parent=1 // pred_fallthru
      _
    // Predicated region
    $region46: #{tpu_custom_call.1} parent=1 // pred_check
      _
    $region47: #{tpu_custom_call.1} parent=1 // pred_check_branch
      %1465 = sbr.rel (0) target = $region49
    $region48: #{tpu_custom_call.1} parent=1 // pred_region
      %1466 = dma.done [#allocation4], 128
    $region49: #{tpu_custom_call.1} parent=1 // pred_fallthru
      _
    %1467 = vsyncpa [#allocation3], 1
    %1468 = vsyncpa [#allocation6], 1
    %1469 = vsyncpa [#allocation4], 1

</llo_original>
